<compile_context>
chip_gen: v7x
topology: tpu7x:2x2x1
jax: 0.10.0
libtpu: 0.0.40
codegen_flags: <defaults>
</compile_context>

<pallas_src>
import functools

import numpy as np

import jax
import jax.numpy as jnp
from jax.experimental import pallas as pl
from jax.experimental.pallas import tpu as pltpu


# -----------------------------------------------------------------------------
# Adaptive-average-pool matrices (PyTorch bin boundaries, incl. non-uniform)
# -----------------------------------------------------------------------------
def make_adaptive_pool_matrix(in_size, out_size):
    """Row i averages input bin [floor(i*in/out), ceil((i+1)*in/out))."""
    m = np.zeros((out_size, in_size), np.float32)
    for i in range(out_size):
        start = (i * in_size) // out_size
        end = -(-((i + 1) * in_size) // out_size)  # ceil div
        m[i, start:end] = 1.0 / (end - start)
    return m


# -----------------------------------------------------------------------------
# Fused kernel: conv3x3+bias+ReLU  ->  adaptive avg pool  ->  GAP + linear head
# One grid step per batch item; everything stays in VMEM between stages.
# -----------------------------------------------------------------------------
def _encoder_fused_kernel(x_ref, w_ref, cb_ref, p2_ref, wc_ref, bc_ref,
                          feat_ref, attrs_ref):
    # x_ref : (1, H+2, W+2, Cin)   bf16, spatially padded NHWC image
    # w_ref : (9*Cin, Cpad)        bf16 conv taps, row = (dy*3+dx)*Cin + c
    # cb_ref: (1, Cpad)            f32 conv bias  (zero-padded channels)
    # p2_ref: (E*E, H*W)           bf16 kron(pool_rows, pool_cols)
    # wc_ref: (Cpad, A_pad)        f32 classifier weight (zero-padded)
    # bc_ref: (1, A_pad)           f32 classifier bias   (zero-padded)
    _, Hp, Wp, Cin = x_ref.shape
    H, W = Hp - 2, Wp - 2

    # ---- im2col in VMEM: 9 shifted taps concatenated along the channel axis --
    taps = []
    for dy in range(3):
        for dx in range(3):
            taps.append(x_ref[0, pl.ds(dy, H), pl.ds(dx, W), :])   # (H, W, Cin)
    im2col = jnp.concatenate(taps, axis=-1)                        # (H, W, 9*Cin)
    im2col = im2col.reshape(H * W, 9 * Cin)                        # leading collapse

    # ---- conv3x3 (padding=1): single K=9*Cin MXU matmul, f32 accumulation ----
    acc = jnp.dot(im2col, w_ref[...], preferred_element_type=jnp.float32)
    feats = jnp.maximum(acc + cb_ref[...], 0.0)                    # (H*W, Cpad) f32

    # ---- adaptive average pool: single MXU matmul with the kron matrix -------
    # pooled[i*E + j, c] = sum_{h,w} pr[i,h] * pc[j,w] * feats[h*W + w, c]
    pooled = jnp.dot(p2_ref[...], feats.astype(p2_ref.dtype),
                     preferred_element_type=jnp.float32)           # (E*E, Cpad)
    feat_ref[0] = pooled.astype(feat_ref.dtype)                    # lane-dense store

    # ---- classifier head: GAP as a sublane (XLU) reduction + small matmul ----
    gap = jnp.sum(feats, axis=0, keepdims=True) * (1.0 / float(H * W))  # (1, Cpad)
    attrs = jnp.dot(gap, wc_ref[...],
                    preferred_element_type=jnp.float32) + bc_ref[...]   # (1, A_pad)
    attrs_ref[0] = attrs.astype(attrs_ref.dtype)


# -----------------------------------------------------------------------------
# Full Encoder forward
# -----------------------------------------------------------------------------
@functools.partial(jax.jit, static_argnames=("enc_image_size",))
def encoder_forward(images_nchw, params, *, enc_image_size):
    # NCHW (PyTorch) -> NHWC once; all kernel work is channels-last.
    x = jnp.transpose(images_nchw, (0, 2, 3, 1))
    B, H, W, Cin = x.shape
    E = enc_image_size
    conv_w = params["conv_w"]                       # (9, Cin, Cout)
    Cout = conv_w.shape[-1]
    A = params["cls_w"].shape[-1]
    Cpad = ((Cout + 127) // 128) * 128              # lane-dense output channels
    A_pad = ((A + 127) // 128) * 128

    # transpose + pad + bf16 cast fuse into ONE XLA copy (single HBM round trip
    # for the layout change the kernel needs anyway; bf16 halves DMA bytes).
    xpad = jnp.pad(x.astype(jnp.bfloat16), ((0, 0), (1, 1), (1, 1), (0, 0)))

    # Conv weights repacked 2-D (9*Cin, Cpad) bf16; channel padding is free on
    # the MXU (N < 128 and N == 128 are the same pass) and makes all downstream
    # stores unmasked 128-lane slabs.
    w2 = jnp.zeros((9 * Cin, Cpad), jnp.float32)
    w2 = w2.at[:, :Cout].set(conv_w.reshape(9 * Cin, Cout)).astype(jnp.bfloat16)
    cb = jnp.zeros((1, Cpad), jnp.float32).at[:, :Cout].set(params["conv_b"])

    # Combined pooling matrix: kron(rows, cols) -> (E*E, H*W), built at trace
    # time, bf16 MXU feed.
    pool2 = jnp.asarray(np.kron(make_adaptive_pool_matrix(H, E),
                                make_adaptive_pool_matrix(W, E)),
                        dtype=jnp.bfloat16)

    # Lane-dense classifier head (f32: tiny matmul, keeps head numerics exact).
    wc = jnp.zeros((Cpad, A_pad), jnp.float32).at[:Cout, :A].set(params["cls_w"])
    bc = jnp.zeros((1, A_pad), jnp.float32).at[:, :A].set(params["cls_b"])

    feat, attrs = pl.pallas_call(
        _encoder_fused_kernel,
        out_shape=(
            jax.ShapeDtypeStruct((B, E * E, Cpad), jnp.float32),
            jax.ShapeDtypeStruct((B, 1, A_pad), jnp.float32),
        ),
        grid_spec=pltpu.PrefetchScalarGridSpec(
            num_scalar_prefetch=0,
            grid=(B,),
            in_specs=[
                pl.BlockSpec((1, H + 2, W + 2, Cin), lambda b: (b, 0, 0, 0)),
                pl.BlockSpec((9 * Cin, Cpad), lambda b: (0, 0)),
                pl.BlockSpec((1, Cpad), lambda b: (0, 0)),
                pl.BlockSpec((E * E, H * W), lambda b: (0, 0)),
                pl.BlockSpec((Cpad, A_pad), lambda b: (0, 0)),
                pl.BlockSpec((1, A_pad), lambda b: (0, 0)),
            ],
            out_specs=(
                pl.BlockSpec((1, E * E, Cpad), lambda b: (b, 0, 0)),
                pl.BlockSpec((1, 1, A_pad), lambda b: (b, 0, 0)),
            ),
        ),
        compiler_params=pltpu.CompilerParams(
            dimension_semantics=("parallel",),
            vmem_limit_bytes=32 * 1024 * 1024),
    )(xpad, w2, cb, pool2, wc, bc)

    encoder_features = feat[:, :, :Cout].reshape(B, E, E, Cout)
    encoder_attrs = attrs[:, 0, :A]
    return encoder_features, encoder_attrs


# -----------------------------------------------------------------------------
# Synthetic backbone parameters
# -----------------------------------------------------------------------------
def init_params(key, c_in=3, c_enc=32, num_attrs=10):
    k1, k2, k3, k4 = jax.random.split(key, 4)
    conv_w = jax.random.normal(k1, (9, c_in, c_enc), jnp.float32) * 0.1
    conv_b = jax.random.normal(k2, (1, c_enc), jnp.float32) * 0.01
    cls_w = jax.random.normal(k3, (c_enc, num_attrs), jnp.float32) * 0.1
    cls_b = jax.random.normal(k4, (1, num_attrs), jnp.float32) * 0.01
    return {"conv_w": conv_w, "conv_b": conv_b, "cls_w": cls_w, "cls_b": cls_b}


# -----------------------------------------------------------------------------
# Pure-JAX f32 reference (same synthetic backbone) for correctness checking
# -----------------------------------------------------------------------------
def reference_forward(images_nchw, params, enc_image_size):
    x = jnp.transpose(images_nchw, (0, 2, 3, 1)).astype(jnp.float32)
    B, H, W, Cin = x.shape
    Cout = params["conv_w"].shape[-1]
    xp = jnp.pad(x, ((0, 0), (1, 1), (1, 1), (0, 0)))
    w = params["conv_w"]  # (9, Cin, Cout)
    feats = jnp.zeros((B, H, W, Cout), jnp.float32)
    for dy in range(3):
        for dx in range(3):
            feats = feats + jnp.einsum("bhwi,io->bhwo",
                                       xp[:, dy:dy + H, dx:dx + W, :],
                                       w[dy * 3 + dx])
    feats = jnp.maximum(feats + params["conv_b"][0], 0.0)
    pr = jnp.asarray(make_adaptive_pool_matrix(H, enc_image_size))
    pc = jnp.asarray(make_adaptive_pool_matrix(W, enc_image_size))
    pooled = jnp.einsum("eh,fw,bhwc->befc", pr, pc, feats)
    gap = feats.mean(axis=(1, 2))
    attrs = gap @ params["cls_w"] + params["cls_b"]
    return pooled, attrs


if __name__ == "__main__":
    # Small demo shapes: batch=2, 3-channel 16x16 images, encoder_dim=32,
    # encoded_image_size=4, num_attrs=10.
    key = jax.random.PRNGKey(0)
    k_img, k_par = jax.random.split(key)
    B, C_IN, HW = 2, 3, 16
    ENC_SIZE, C_ENC, N_ATTRS = 4, 32, 10

    images = jax.random.normal(k_img, (B, C_IN, HW, HW), jnp.float32)  # NCHW
    params = init_params(k_par, c_in=C_IN, c_enc=C_ENC, num_attrs=N_ATTRS)

    encoder_features, encoder_attrs = encoder_forward(
        images, params, enc_image_size=ENC_SIZE)
    jax.block_until_ready((encoder_features, encoder_attrs))

    assert encoder_features.shape == (B, ENC_SIZE, ENC_SIZE, C_ENC)
    assert encoder_attrs.shape == (B, N_ATTRS)

    # Tolerance accounts for bf16 MXU operand feed (f32 accumulation).
    ref_feats, ref_attrs = reference_forward(images, params, ENC_SIZE)
    assert bool(jnp.allclose(encoder_features, ref_feats, rtol=2e-2, atol=1e-2))
    assert bool(jnp.allclose(encoder_attrs, ref_attrs, rtol=2e-2, atol=1e-2))

    # TODO(synk): real pretrained EfficientNet backbone weights are external;
    # the synthetic conv backbone reproduces the structure, not the checkpoint.
    print("KERNEL_OK")
</pallas_src>

<mosaic_0001>
module attributes {stable_mosaic.version = 11 : i64} {
  func.func @_encoder_fused_kernel(%arg0: i32, %arg1: memref<1x18x18x3xbf16, #tpu.memory_space<vmem>>, %arg2: memref<27x128xbf16, #tpu.memory_space<vmem>>, %arg3: memref<1x128xf32, #tpu.memory_space<vmem>>, %arg4: memref<16x256xbf16, #tpu.memory_space<vmem>>, %arg5: memref<128x128xf32, #tpu.memory_space<vmem>>, %arg6: memref<1x128xf32, #tpu.memory_space<vmem>>, %arg7: memref<1x16x128xf32, #tpu.memory_space<vmem>>, %arg8: memref<1x1x128xf32, #tpu.memory_space<vmem>>) attributes {dimension_semantics = [#tpu.dimension_semantics<parallel>], iteration_bounds = array<i64: 2>, scalar_prefetch = 0 : i64, scratch_operands = 0 : i64, tpu.core_type = #tpu.core_type<tc>, window_params = [{transform_indices = @transform_0, window_bounds = array<i64: 1, 18, 18, 3>}, {pipeline_mode = #tpu.pipeline_mode<synchronous>, transform_indices = @transform_1, window_bounds = array<i64: 27, 128>}, {pipeline_mode = #tpu.pipeline_mode<synchronous>, transform_indices = @transform_2, window_bounds = array<i64: 1, 128>}, {pipeline_mode = #tpu.pipeline_mode<synchronous>, transform_indices = @transform_3, window_bounds = array<i64: 16, 256>}, {pipeline_mode = #tpu.pipeline_mode<synchronous>, transform_indices = @transform_4, window_bounds = array<i64: 128, 128>}, {pipeline_mode = #tpu.pipeline_mode<synchronous>, transform_indices = @transform_5, window_bounds = array<i64: 1, 128>}, {transform_indices = @transform_6, window_bounds = array<i64: 1, 16, 128>}, {transform_indices = @transform_7, window_bounds = array<i64: 1, 1, 128>}]} {
    %c0 = arith.constant 0 : index
    %c0_0 = arith.constant 0 : index
    %c0_1 = arith.constant 0 : index
    %c0_2 = arith.constant 0 : index
    %0 = vector.load %arg1[%c0, %c0_0, %c0_1, %c0_2] : memref<1x18x18x3xbf16, #tpu.memory_space<vmem>>, vector<1x16x16x3xbf16>
    %1 = vector.shape_cast %0 : vector<1x16x16x3xbf16> to vector<16x16x3xbf16>
    %c0_3 = arith.constant 0 : index
    %c0_4 = arith.constant 0 : index
    %c1 = arith.constant 1 : index
    %c0_5 = arith.constant 0 : index
    %2 = vector.load %arg1[%c0_3, %c0_4, %c1, %c0_5] : memref<1x18x18x3xbf16, #tpu.memory_space<vmem>>, vector<1x16x16x3xbf16>
    %3 = vector.shape_cast %2 : vector<1x16x16x3xbf16> to vector<16x16x3xbf16>
    %c0_6 = arith.constant 0 : index
    %c0_7 = arith.constant 0 : index
    %c2 = arith.constant 2 : index
    %c0_8 = arith.constant 0 : index
    %4 = vector.load %arg1[%c0_6, %c0_7, %c2, %c0_8] : memref<1x18x18x3xbf16, #tpu.memory_space<vmem>>, vector<1x16x16x3xbf16>
    %5 = vector.shape_cast %4 : vector<1x16x16x3xbf16> to vector<16x16x3xbf16>
    %c0_9 = arith.constant 0 : index
    %c1_10 = arith.constant 1 : index
    %c0_11 = arith.constant 0 : index
    %c0_12 = arith.constant 0 : index
    %6 = vector.load %arg1[%c0_9, %c1_10, %c0_11, %c0_12] : memref<1x18x18x3xbf16, #tpu.memory_space<vmem>>, vector<1x16x16x3xbf16>
    %7 = vector.shape_cast %6 : vector<1x16x16x3xbf16> to vector<16x16x3xbf16>
    %c0_13 = arith.constant 0 : index
    %c1_14 = arith.constant 1 : index
    %c1_15 = arith.constant 1 : index
    %c0_16 = arith.constant 0 : index
    %8 = vector.load %arg1[%c0_13, %c1_14, %c1_15, %c0_16] : memref<1x18x18x3xbf16, #tpu.memory_space<vmem>>, vector<1x16x16x3xbf16>
    %9 = vector.shape_cast %8 : vector<1x16x16x3xbf16> to vector<16x16x3xbf16>
    %c0_17 = arith.constant 0 : index
    %c1_18 = arith.constant 1 : index
    %c2_19 = arith.constant 2 : index
    %c0_20 = arith.constant 0 : index
    %10 = vector.load %arg1[%c0_17, %c1_18, %c2_19, %c0_20] : memref<1x18x18x3xbf16, #tpu.memory_space<vmem>>, vector<1x16x16x3xbf16>
    %11 = vector.shape_cast %10 : vector<1x16x16x3xbf16> to vector<16x16x3xbf16>
    %c0_21 = arith.constant 0 : index
    %c2_22 = arith.constant 2 : index
    %c0_23 = arith.constant 0 : index
    %c0_24 = arith.constant 0 : index
    %12 = vector.load %arg1[%c0_21, %c2_22, %c0_23, %c0_24] : memref<1x18x18x3xbf16, #tpu.memory_space<vmem>>, vector<1x16x16x3xbf16>
    %13 = vector.shape_cast %12 : vector<1x16x16x3xbf16> to vector<16x16x3xbf16>
    %c0_25 = arith.constant 0 : index
    %c2_26 = arith.constant 2 : index
    %c1_27 = arith.constant 1 : index
    %c0_28 = arith.constant 0 : index
    %14 = vector.load %arg1[%c0_25, %c2_26, %c1_27, %c0_28] : memref<1x18x18x3xbf16, #tpu.memory_space<vmem>>, vector<1x16x16x3xbf16>
    %15 = vector.shape_cast %14 : vector<1x16x16x3xbf16> to vector<16x16x3xbf16>
    %c0_29 = arith.constant 0 : index
    %c2_30 = arith.constant 2 : index
    %c2_31 = arith.constant 2 : index
    %c0_32 = arith.constant 0 : index
    %16 = vector.load %arg1[%c0_29, %c2_30, %c2_31, %c0_32] : memref<1x18x18x3xbf16, #tpu.memory_space<vmem>>, vector<1x16x16x3xbf16>
    %17 = vector.shape_cast %16 : vector<1x16x16x3xbf16> to vector<16x16x3xbf16>
    %18 = tpu.concatenate %1, %3, %5, %7, %9, %11, %13, %15, %17 in 2 : vector<16x16x3xbf16>, vector<16x16x3xbf16>, vector<16x16x3xbf16>, vector<16x16x3xbf16>, vector<16x16x3xbf16>, vector<16x16x3xbf16>, vector<16x16x3xbf16>, vector<16x16x3xbf16>, vector<16x16x3xbf16> -> vector<16x16x27xbf16>
    %19 = vector.shape_cast %18 : vector<16x16x27xbf16> to vector<256x27xbf16>
    %c0_33 = arith.constant 0 : index
    %c0_34 = arith.constant 0 : index
    %20 = vector.load %arg2[%c0_33, %c0_34] : memref<27x128xbf16, #tpu.memory_space<vmem>>, vector<27x128xbf16>
    %cst = arith.constant dense<0.000000e+00> : vector<256x128xf32>
    %21 = tpu.matmul %19, %20, %cst {dimension_numbers = #tpu.dot_dimension_numbers<[1], [0], [0], [1], [0, 0, 1, 1], [], []>} : vector<256x27xbf16>, vector<27x128xbf16>, vector<256x128xf32> -> vector<256x128xf32>
    %c0_35 = arith.constant 0 : index
    %c0_36 = arith.constant 0 : index
    %22 = vector.load %arg3[%c0_35, %c0_36] : memref<1x128xf32, #tpu.memory_space<vmem>>, vector<1x128xf32>
    %23 = vector.broadcast %22 : vector<1x128xf32> to vector<256x128xf32>
    %24 = arith.addf %21, %23 : vector<256x128xf32>
    %cst_37 = arith.constant 0.000000e+00 : f32
    %25 = vector.broadcast %cst_37 : f32 to vector<256x128xf32>
    %26 = arith.maximumf %24, %25 : vector<256x128xf32>
    %c0_38 = arith.constant 0 : index
    %c0_39 = arith.constant 0 : index
    %27 = vector.load %arg4[%c0_38, %c0_39] : memref<16x256xbf16, #tpu.memory_space<vmem>>, vector<16x256xbf16>
    %28 = arith.truncf %26 : vector<256x128xf32> to vector<256x128xbf16>
    %cst_40 = arith.constant dense<0.000000e+00> : vector<16x128xf32>
    %29 = tpu.matmul %27, %28, %cst_40 {dimension_numbers = #tpu.dot_dimension_numbers<[1], [0], [0], [1], [0, 0, 1, 1], [], []>} : vector<16x256xbf16>, vector<256x128xbf16>, vector<16x128xf32> -> vector<16x128xf32>
    %c0_41 = arith.constant 0 : index
    %c0_42 = arith.constant 0 : index
    %c0_43 = arith.constant 0 : index
    %30 = vector.load %arg7[%c0_41, %c0_42, %c0_43] : memref<1x16x128xf32, #tpu.memory_space<vmem>>, vector<1x16x128xf32>
    %31 = vector.shape_cast %30 : vector<1x16x128xf32> to vector<16x128xf32>
    %32 = vector.shape_cast %29 : vector<16x128xf32> to vector<1x16x128xf32>
    tpu.vector_store %arg7[%c0_41, %c0_42, %c0_43], %32 {strides = array<i32>} : memref<1x16x128xf32, #tpu.memory_space<vmem>>, vector<1x16x128xf32>,
    %cst_44 = arith.constant dense<0.000000e+00> : vector<128xf32>
    %33 = vector.multi_reduction <add>, %26, %cst_44 [0] : vector<256x128xf32> to vector<128xf32>
    %34 = vector.shape_cast %33 : vector<128xf32> to vector<1x128xf32>
    %cst_45 = arith.constant 3.906250e-03 : f32
    %35 = vector.broadcast %cst_45 : f32 to vector<1x128xf32>
    %36 = arith.mulf %34, %35 : vector<1x128xf32>
    %c0_46 = arith.constant 0 : index
    %c0_47 = arith.constant 0 : index
    %37 = vector.load %arg5[%c0_46, %c0_47] : memref<128x128xf32, #tpu.memory_space<vmem>>, vector<128x128xf32>
    %cst_48 = arith.constant dense<0.000000e+00> : vector<1x128xf32>
    %38 = tpu.matmul %36, %37, %cst_48 {dimension_numbers = #tpu.dot_dimension_numbers<[1], [0], [0], [1], [0, 0, 1, 1], [], []>} : vector<1x128xf32>, vector<128x128xf32>, vector<1x128xf32> -> vector<1x128xf32>
    %c0_49 = arith.constant 0 : index
    %c0_50 = arith.constant 0 : index
    %39 = vector.load %arg6[%c0_49, %c0_50] : memref<1x128xf32, #tpu.memory_space<vmem>>, vector<1x128xf32>
    %40 = arith.addf %38, %39 : vector<1x128xf32>
    %c0_51 = arith.constant 0 : index
    %c0_52 = arith.constant 0 : index
    %c0_53 = arith.constant 0 : index
    %41 = vector.load %arg8[%c0_51, %c0_52, %c0_53] : memref<1x1x128xf32, #tpu.memory_space<vmem>>, vector<1x1x128xf32>
    %42 = vector.shape_cast %41 : vector<1x1x128xf32> to vector<1x128xf32>
    %43 = vector.shape_cast %40 : vector<1x128xf32> to vector<1x1x128xf32>
    tpu.vector_store %arg8[%c0_51, %c0_52, %c0_53], %43 {strides = array<i32>} : memref<1x1x128xf32, #tpu.memory_space<vmem>>, vector<1x1x128xf32>,
    return
  }
  func.func @transform_0(%arg0: i32) -> (i32, i32, i32, i32) {
    %c0_i32 = arith.constant 0 : i32
    %c0_i32_0 = arith.constant 0 : i32
    %c0_i32_1 = arith.constant 0 : i32
    %c0_i32_2 = arith.constant 0 : i32
    return %arg0, %c0_i32, %c0_i32_0, %c0_i32_1 : i32, i32, i32, i32
  }
  func.func @transform_1(%arg0: i32) -> (i32, i32) {
    %c0_i32 = arith.constant 0 : i32
    %c0_i32_0 = arith.constant 0 : i32
    %c0_i32_1 = arith.constant 0 : i32
    return %c0_i32, %c0_i32_0 : i32, i32
  }
  func.func @transform_2(%arg0: i32) -> (i32, i32) {
    %c0_i32 = arith.constant 0 : i32
    %c0_i32_0 = arith.constant 0 : i32
    %c0_i32_1 = arith.constant 0 : i32
    return %c0_i32, %c0_i32_0 : i32, i32
  }
  func.func @transform_3(%arg0: i32) -> (i32, i32) {
    %c0_i32 = arith.constant 0 : i32
    %c0_i32_0 = arith.constant 0 : i32
    %c0_i32_1 = arith.constant 0 : i32
    return %c0_i32, %c0_i32_0 : i32, i32
  }
  func.func @transform_4(%arg0: i32) -> (i32, i32) {
    %c0_i32 = arith.constant 0 : i32
    %c0_i32_0 = arith.constant 0 : i32
    %c0_i32_1 = arith.constant 0 : i32
    return %c0_i32, %c0_i32_0 : i32, i32
  }
  func.func @transform_5(%arg0: i32) -> (i32, i32) {
    %c0_i32 = arith.constant 0 : i32
    %c0_i32_0 = arith.constant 0 : i32
    %c0_i32_1 = arith.constant 0 : i32
    return %c0_i32, %c0_i32_0 : i32, i32
  }
  func.func @transform_6(%arg0: i32) -> (i32, i32, i32) {
    %c0_i32 = arith.constant 0 : i32
    %c0_i32_0 = arith.constant 0 : i32
    %c0_i32_1 = arith.constant 0 : i32
    return %arg0, %c0_i32, %c0_i32_0 : i32, i32, i32
  }
  func.func @transform_7(%arg0: i32) -> (i32, i32, i32) {
    %c0_i32 = arith.constant 0 : i32
    %c0_i32_0 = arith.constant 0 : i32
    %c0_i32_1 = arith.constant 0 : i32
    return %arg0, %c0_i32, %c0_i32_0 : i32, i32, i32
  }
}

</mosaic_0001>

<llo_original>
// kernel: encoder_forward.1
$region0: #{encoder_forward.1}
  #allocation0 [shape = 'u32[]', space=smem, size = 0x4, offset = 0x4, fixed_abs, tag = 'smem constant byte address 0x4 - core index']
  #allocation1 [shape = 'u32[144,128]{1,0:T(1,128)}', space=vmem, size = 0x12000, scoped, tag = 'internal scratch']
  %s0 = inlined_call_operand.vmem [shape: bf16[2,18,18,3], index: 0, kind: input, shape index: {}]
  %s1 = inlined_call_operand.vmem [shape: bf16[27,128], index: 1, kind: input, shape index: {}]
  %s2 = inlined_call_operand.vmem [shape: f32[1,128], index: 2, kind: input, shape index: {}]
  %s3 = inlined_call_operand.vmem [shape: bf16[16,256], index: 3, kind: input, shape index: {}]
  %s4 = inlined_call_operand.vmem [shape: f32[128,128], index: 4, kind: input, shape index: {}]
  %s5 = inlined_call_operand.vmem [shape: f32[1,128], index: 5, kind: input, shape index: {}]
  %s6 = inlined_call_operand.hbm [shape: f32[2,16,128], index: 6, kind: output, shape index: {0}]
  %s7 = inlined_call_operand.hbm [shape: f32[2,1,128], index: 7, kind: output, shape index: {1}]
  %8 = xla_tuple %s6, %s7
  %s9 = sld [smem:[#allocation0]]
  $region65: #{encoder_forward.1} parent=0
    _
  %s11 = ssub.s32 1, %s9
  %s12 = scalar_select 0, %s11, %s9
  $region1: #{encoder_forward.1} parent=0
    #allocation2 [shape = 'u8[16384]{0}', space=vmem, size = 0x4000, scoped, tag = 'output window, operand 0']
    #allocation3 [shape = 's32[2]{0}', space=sflag, size = 0x8, scoped, tag = 'scoped memory for encoder_forward.1']
    #allocation4 [shape = 'u8[1024]{0}', space=vmem, size = 0x400, scoped, tag = 'output window, operand 1']
    #allocation5 [shape = 's32[2]{0}', space=sflag, size = 0x8, scoped, tag = 'scoped memory for encoder_forward.1']
    %13 = vsyncpa [#allocation3], 0
    %s14 = scalar_lea.sflag [#allocation3], 1
    %15 = vsyncpa %s14, 0
    %16 = vsyncpa [#allocation5], 0
    %s17 = scalar_lea.sflag [#allocation5], 1
    %18 = vsyncpa %s17, 0
    loop: start=0, step=1, limit=4
    $region2: #{encoder_forward.1} parent=1 // loop_pre_header
      _
    $region3: #{encoder_forward.1} parent=1 // loop_header
      %s20 = sphi 0, %s24
      %p21 = scmp.ge.s32.totalorder %s20, 4
      %s30 = sphi 0, %s32
      %s33 = sphi 0, %s30
      %s34 = sphi 0, %s33
      %s50 = sphi 0, %s34
      %s54 = sphi 0, %s54
      %s56 = sphi 0, %s54
      %s57 = sphi 0, %s56
      %s71 = sphi 0, %s57
      %s75 = sphi 0, %s75
      %s77 = sphi 0, %s75
      %s78 = sphi 0, %s77
      %s92 = sphi 0, %s78
      %s96 = sphi 0, %s96
      %s98 = sphi 0, %s96
      %s99 = sphi 0, %s98
      %s113 = sphi 0, %s99
      %s117 = sphi 0, %s117
      %s119 = sphi 0, %s117
      %s120 = sphi 0, %s119
      %s134 = sphi 0, %s120
      %s138 = sphi 0, %s138
      %s140 = sphi 0, %s138
      %s141 = sphi 0, %s140
      %s155 = sphi 0, %s141
      %s161 = sphi 0, %s163
      %s164 = sphi 0, %s161
      %s165 = sphi 0, %s164
      %s181 = sphi 0, %s165
      %s187 = sphi 0, %s189
      %s190 = sphi 0, %s187
      %s191 = sphi 0, %s190
      %s207 = sphi 0, %s191
    $region4: #{encoder_forward.1} parent=1 // loop_header_branch
      %23 = sbr.rel (%p21) target = $region8
    $region5: #{encoder_forward.1} parent=1 // loop_body
      %s25 = ssub.s32 %s20, 1
      %s26 = ssub.s32 %s20, 2
      %s27 = sadd.s32 %s20, 1
      %s28 = ssub.s32 %s20, %s27
      %p29 = scmp.eq.s32.totalorder %s28, 0
      %s31 = sadd.s32 %s30, 1
      %s32 = scalar_select %p29, %s30, %s31
      %p35 = pneg %p29
      %p36 = scmp.eq.s32.totalorder %s20, 1
      %p37 = por %p35, %p36
      %p38 = scmp.ne.s32.totalorder %s30, %s33
      %p39 = scmp.eq.s32.totalorder %s20, 0
      %p40 = por %p38, %p39
      %p41 = scmp.ne.s32.totalorder %s30, %s33
      %p42 = scmp.eq.s32.totalorder %s25, 1
      %p43 = por %p41, %p42
      %p44 = scmp.ne.s32.totalorder %s33, %s34
      %p45 = scmp.eq.s32.totalorder %s25, 0
      %p46 = por %p44, %p45
      %p47 = scmp.ne.s32.totalorder %s33, %s34
      %p48 = scmp.eq.s32.totalorder %s26, 1
      %p49 = por %p47, %p48
      %p51 = scmp.ne.s32.totalorder %s34, %s50
      %p52 = scmp.eq.s32.totalorder %s26, 0
      %p53 = por %p51, %p52
      %s55 = sadd.s32 %s54, 1
      %p58 = scmp.eq.s32.totalorder %s20, 1
      %p59 = scmp.ne.s32.totalorder %s54, %s56
      %p60 = scmp.eq.s32.totalorder %s20, 0
      %p61 = por %p59, %p60
      %p62 = scmp.ne.s32.totalorder %s54, %s56
      %p63 = scmp.eq.s32.totalorder %s25, 1
      %p64 = por %p62, %p63
      %p65 = scmp.ne.s32.totalorder %s56, %s57
      %p66 = scmp.eq.s32.totalorder %s25, 0
      %p67 = por %p65, %p66
      %p68 = scmp.ne.s32.totalorder %s56, %s57
      %p69 = scmp.eq.s32.totalorder %s26, 1
      %p70 = por %p68, %p69
      %p72 = scmp.ne.s32.totalorder %s57, %s71
      %p73 = scmp.eq.s32.totalorder %s26, 0
      %p74 = por %p72, %p73
      %s76 = sadd.s32 %s75, 1
      %p79 = scmp.eq.s32.totalorder %s20, 1
      %p80 = scmp.ne.s32.totalorder %s75, %s77
      %p81 = scmp.eq.s32.totalorder %s20, 0
      %p82 = por %p80, %p81
      %p83 = scmp.ne.s32.totalorder %s75, %s77
      %p84 = scmp.eq.s32.totalorder %s25, 1
      %p85 = por %p83, %p84
      %p86 = scmp.ne.s32.totalorder %s77, %s78
      %p87 = scmp.eq.s32.totalorder %s25, 0
      %p88 = por %p86, %p87
      %p89 = scmp.ne.s32.totalorder %s77, %s78
      %p90 = scmp.eq.s32.totalorder %s26, 1
      %p91 = por %p89, %p90
      %p93 = scmp.ne.s32.totalorder %s78, %s92
      %p94 = scmp.eq.s32.totalorder %s26, 0
      %p95 = por %p93, %p94
      %s97 = sadd.s32 %s96, 1
      %p100 = scmp.eq.s32.totalorder %s20, 1
      %p101 = scmp.ne.s32.totalorder %s96, %s98
      %p102 = scmp.eq.s32.totalorder %s20, 0
      %p103 = por %p101, %p102
      %p104 = scmp.ne.s32.totalorder %s96, %s98
      %p105 = scmp.eq.s32.totalorder %s25, 1
      %p106 = por %p104, %p105
      %p107 = scmp.ne.s32.totalorder %s98, %s99
      %p108 = scmp.eq.s32.totalorder %s25, 0
      %p109 = por %p107, %p108
      %p110 = scmp.ne.s32.totalorder %s98, %s99
      %p111 = scmp.eq.s32.totalorder %s26, 1
      %p112 = por %p110, %p111
      %p114 = scmp.ne.s32.totalorder %s99, %s113
      %p115 = scmp.eq.s32.totalorder %s26, 0
      %p116 = por %p114, %p115
      %s118 = sadd.s32 %s117, 1
      %p121 = scmp.eq.s32.totalorder %s20, 1
      %p122 = scmp.ne.s32.totalorder %s117, %s119
      %p123 = scmp.eq.s32.totalorder %s20, 0
      %p124 = por %p122, %p123
      %p125 = scmp.ne.s32.totalorder %s117, %s119
      %p126 = scmp.eq.s32.totalorder %s25, 1
      %p127 = por %p125, %p126
      %p128 = scmp.ne.s32.totalorder %s119, %s120
      %p129 = scmp.eq.s32.totalorder %s25, 0
      %p130 = por %p128, %p129
      %p131 = scmp.ne.s32.totalorder %s119, %s120
      %p132 = scmp.eq.s32.totalorder %s26, 1
      %p133 = por %p131, %p132
      %p135 = scmp.ne.s32.totalorder %s120, %s134
      %p136 = scmp.eq.s32.totalorder %s26, 0
      %p137 = por %p135, %p136
      %s139 = sadd.s32 %s138, 1
      %p142 = scmp.eq.s32.totalorder %s20, 1
      %p143 = scmp.ne.s32.totalorder %s138, %s140
      %p144 = scmp.eq.s32.totalorder %s20, 0
      %p145 = por %p143, %p144
      %p146 = scmp.ne.s32.totalorder %s138, %s140
      %p147 = scmp.eq.s32.totalorder %s25, 1
      %p148 = por %p146, %p147
      %p149 = scmp.ne.s32.totalorder %s140, %s141
      %p150 = scmp.eq.s32.totalorder %s25, 0
      %p151 = por %p149, %p150
      %p152 = scmp.ne.s32.totalorder %s140, %s141
      %p153 = scmp.eq.s32.totalorder %s26, 1
      %p154 = por %p152, %p153
      %p156 = scmp.ne.s32.totalorder %s141, %s155
      %p157 = scmp.eq.s32.totalorder %s26, 0
      %p158 = por %p156, %p157
      %s159 = ssub.s32 %s20, %s27
      %p160 = scmp.eq.s32.totalorder %s159, 0
      %s162 = sadd.s32 %s161, 1
      %s163 = scalar_select %p160, %s161, %s162
      %p166 = pneg %p160
      %p167 = scmp.eq.s32.totalorder %s20, 1
      %p168 = por %p166, %p167
      %p169 = scmp.ne.s32.totalorder %s161, %s164
      %p170 = scmp.eq.s32.totalorder %s20, 0
      %p171 = por %p169, %p170
      %p172 = scmp.ne.s32.totalorder %s161, %s164
      %p173 = scmp.eq.s32.totalorder %s25, 1
      %p174 = por %p172, %p173
      %p175 = scmp.ne.s32.totalorder %s164, %s165
      %p176 = scmp.eq.s32.totalorder %s25, 0
      %p177 = por %p175, %p176
      %p178 = scmp.ne.s32.totalorder %s164, %s165
      %p179 = scmp.eq.s32.totalorder %s26, 1
      %p180 = por %p178, %p179
      %p182 = scmp.ne.s32.totalorder %s165, %s181
      %p183 = scmp.eq.s32.totalorder %s26, 0
      %p184 = por %p182, %p183
      %s185 = ssub.s32 %s20, %s27
      %p186 = scmp.eq.s32.totalorder %s185, 0
      %s188 = sadd.s32 %s187, 1
      %s189 = scalar_select %p186, %s187, %s188
      %p192 = pneg %p186
      %p193 = scmp.eq.s32.totalorder %s20, 1
      %p194 = por %p192, %p193
      %p195 = scmp.ne.s32.totalorder %s187, %s190
      %p196 = scmp.eq.s32.totalorder %s20, 0
      %p197 = por %p195, %p196
      %p198 = scmp.ne.s32.totalorder %s187, %s190
      %p199 = scmp.eq.s32.totalorder %s25, 1
      %p200 = por %p198, %p199
      %p201 = scmp.ne.s32.totalorder %s190, %s191
      %p202 = scmp.eq.s32.totalorder %s25, 0
      %p203 = por %p201, %p202
      %p204 = scmp.ne.s32.totalorder %s190, %s191
      %p205 = scmp.eq.s32.totalorder %s26, 1
      %p206 = por %p204, %p205
      %p208 = scmp.ne.s32.totalorder %s191, %s207
      %p209 = scmp.eq.s32.totalorder %s26, 0
      %p210 = por %p208, %p209
      %p211 = scmp.le.s32.totalorder 1, %s20
      %p212 = scmp.lt.s32.totalorder %s20, 3
      %p213 = pnand %p211, %p212
      %p214 = pneg %p213
      // Predicated region
      $region9: #{encoder_forward.1} parent=5 // pred_check
        _
      $region10: #{encoder_forward.1} parent=5 // pred_check_branch
        %216 = sbr.rel (%p213) target = $region12
      $region11: #{encoder_forward.1} parent=5 // pred_region
        %s217 = ssub.s32 %s20, 1
        // Predicated region
        $region13: #{encoder_forward.1} parent=11 // pred_check
          %p218 = pneg %p67
        $region14: #{encoder_forward.1} parent=11 // pred_check_branch
          %220 = sbr.rel (%p218) target = $region16
        $region15: #{encoder_forward.1} parent=11 // pred_region
          _
        $region16: #{encoder_forward.1} parent=11 // pred_fallthru
          _
        // Predicated region
        $region17: #{encoder_forward.1} parent=11 // pred_check
          %p221 = pneg %p88
        $region18: #{encoder_forward.1} parent=11 // pred_check_branch
          %223 = sbr.rel (%p221) target = $region20
        $region19: #{encoder_forward.1} parent=11 // pred_region
          _
        $region20: #{encoder_forward.1} parent=11 // pred_fallthru
          _
        // Predicated region
        $region21: #{encoder_forward.1} parent=11 // pred_check
          %p224 = pneg %p109
        $region22: #{encoder_forward.1} parent=11 // pred_check_branch
          %226 = sbr.rel (%p224) target = $region24
        $region23: #{encoder_forward.1} parent=11 // pred_region
          _
        $region24: #{encoder_forward.1} parent=11 // pred_fallthru
          _
        // Predicated region
        $region25: #{encoder_forward.1} parent=11 // pred_check
          %p227 = pneg %p130
        $region26: #{encoder_forward.1} parent=11 // pred_check_branch
          %229 = sbr.rel (%p227) target = $region28
        $region27: #{encoder_forward.1} parent=11 // pred_region
          _
        $region28: #{encoder_forward.1} parent=11 // pred_fallthru
          _
        // Predicated region
        $region29: #{encoder_forward.1} parent=11 // pred_check
          %p230 = pneg %p151
        $region30: #{encoder_forward.1} parent=11 // pred_check_branch
          %232 = sbr.rel (%p230) target = $region32
        $region31: #{encoder_forward.1} parent=11 // pred_region
          _
        $region32: #{encoder_forward.1} parent=11 // pred_fallthru
          _
      $region12: #{encoder_forward.1} parent=5 // pred_fallthru
        _
      %p233 = scmp.lt.s32.totalorder %s20, 2
      // Predicated region
      $region33: #{encoder_forward.1} parent=5 // pred_check
        %p234 = pneg %p233
      $region34: #{encoder_forward.1} parent=5 // pred_check_branch
        %236 = sbr.rel (%p234) target = $region36
      $region35: #{encoder_forward.1} parent=5 // pred_region
        // Predicated region
        $region37: #{encoder_forward.1} parent=35 // pred_check
          %p237 = pneg %p40
        $region38: #{encoder_forward.1} parent=35 // pred_check_branch
          %239 = sbr.rel (%p237) target = $region40
        $region39: #{encoder_forward.1} parent=35 // pred_region
          %p240 = scmp.lt.s32.totalorder %s20, 1
          %s241 = scalar_select %p240, %s20, 1
          %s242 = smul.addr %s241, 54
          %s243 = smul.addr %s242, 4
          %s244 = scalar_lea.vmem %s0, %s243
        $region40: #{encoder_forward.1} parent=35 // pred_fallthru
          _
      $region36: #{encoder_forward.1} parent=5 // pred_fallthru
        _
      %p245 = scmp.le.s32.totalorder 1, %s20
      %p246 = scmp.lt.s32.totalorder %s20, 3
      %p247 = pnand %p245, %p246
      %p248 = pneg %p247
      // Predicated region
      $region41: #{encoder_forward.1} parent=5 // pred_check
        _
      $region42: #{encoder_forward.1} parent=5 // pred_check_branch
        %250 = sbr.rel (%p247) target = $region44
      $region43: #{encoder_forward.1} parent=5 // pred_region
        %s251 = ssub.s32 %s20, 1
        %p252 = scmp.lt.s32.totalorder %s25, 1
        %s253 = scalar_select %p252, %s25, 1
        %s254 = smul.addr %s253, 54
        %s255 = smul.addr %s254, 4
        %s256 = scalar_lea.vmem %s0, %s255
        %p257 = pneg %p46
        %p258 = pneg %p43
        %p259 = pneg %p67
        %p260 = pneg %p64
        %p261 = pneg %p88
        %p262 = pneg %p85
        %p263 = pneg %p109
        %p264 = pneg %p106
        %p265 = pneg %p130
        %p266 = pneg %p127
        %p267 = pneg %p151
        %p268 = pneg %p148
        %p269 = pneg %p177
        %p270 = pneg %p174
        %s271 = sand.u32 %s164, 1
        %s272 = scalar_lea.sflag [#allocation3], %s271
        %s273 = sand.u32 %s164, 1
        %s274 = smul.addr %s273, 16
        %s275 = scalar_lea.vmem [#allocation2], %s274
        %p276 = pneg %p203
        %p277 = pneg %p200
        %s278 = sand.u32 %s190, 1
        %s279 = scalar_lea.sflag [#allocation5], %s278
        %s280 = sand.u32 %s190, 1
        %s281 = scalar_lea.vmem [#allocation4], %s280
        %p282 = scmp.lt.s32.totalorder %s25, 1
        %s283 = scalar_select %p282, %s25, 1
        %s284 = smul.addr %s283, 54
        %s285 = smul.addr %s284, 4
        %s286 = scalar_lea.vmem %s0, %s285
        %v288 = vld [vmem:[%s286] sm:$0xf]
        %v289 = vld [vmem:[%s286 + $0x4] sm:$0xf]
        %v290 = vld [vmem:[%s286 + $0xc] sm:$0xf]
        %v291 = vld [vmem:[%s286 + $0x10] sm:$0xf]
        %v292 = vld [vmem:[%s286 + $0x18] sm:$0xf]
        %v293 = vld [vmem:[%s286 + $0x1c] sm:$0xf]
        %v294 = vld [vmem:[%s286 + $0x24] sm:$0xf]
        %v295 = vld [vmem:[%s286 + $0x28] sm:$0xf]
        %v296 = vld [vmem:[%s286 + $0x30] sm:$0xf]
        %v297 = vld [vmem:[%s286 + $0x34] sm:$0xf]
        %v298 = vld [vmem:[%s286 + $0x3c] sm:$0xf]
        %v299 = vld [vmem:[%s286 + $0x40] sm:$0xf]
        %v300 = vld [vmem:[%s286 + $0x48] sm:$0xf]
        %v301 = vld [vmem:[%s286 + $0x4c] sm:$0xf]
        %v302 = vld [vmem:[%s286 + $0x54] sm:$0xf]
        %v303 = vld [vmem:[%s286 + $0x58] sm:$0xf]
        %v304 = vld [vmem:[%s286 + $0x60] sm:$0xf]
        %v305 = vld [vmem:[%s286 + $0x64] sm:$0xf]
        %v306 = vld [vmem:[%s286 + $0x6c] sm:$0xf]
        %v307 = vld [vmem:[%s286 + $0x70] sm:$0xf]
        %v308 = vld [vmem:[%s286 + $0x78] sm:$0xf]
        %v309 = vld [vmem:[%s286 + $0x7c] sm:$0xf]
        %v310 = vld [vmem:[%s286 + $0x84] sm:$0xf]
        %v311 = vld [vmem:[%s286 + $0x88] sm:$0xf]
        %v312 = vld [vmem:[%s286 + $0x90] sm:$0xf]
        %v313 = vld [vmem:[%s286 + $0x94] sm:$0xf]
        %v314 = vld [vmem:[%s286 + $0x9c] sm:$0xf]
        %v315 = vld [vmem:[%s286 + $0xa0] sm:$0xf]
        %v316 = vld [vmem:[%s286 + $0xa8] sm:$0xf]
        %v317 = vld [vmem:[%s286 + $0xac] sm:$0xf]
        %v318 = vld [vmem:[%s286 + $0xb4] sm:$0xf]
        %v319 = vld [vmem:[%s286 + $0xb8] sm:$0xf]
        %v320 = vld [vmem:[%s286 + $0x8] sm:$0x1]
        %v321 = vld [vmem:[%s286 + $0x14] sm:$0x1]
        %v322 = vld [vmem:[%s286 + $0x20] sm:$0x1]
        %v323 = vld [vmem:[%s286 + $0x2c] sm:$0x1]
        %v324 = vld [vmem:[%s286 + $0x38] sm:$0x1]
        %v325 = vld [vmem:[%s286 + $0x44] sm:$0x1]
        %v326 = vld [vmem:[%s286 + $0x50] sm:$0x1]
        %v327 = vld [vmem:[%s286 + $0x5c] sm:$0x1]
        %v328 = vld [vmem:[%s286 + $0x68] sm:$0x1]
        %v329 = vld [vmem:[%s286 + $0x74] sm:$0x1]
        %v330 = vld [vmem:[%s286 + $0x80] sm:$0x1]
        %v331 = vld [vmem:[%s286 + $0x8c] sm:$0x1]
        %v332 = vld [vmem:[%s286 + $0x98] sm:$0x1]
        %v333 = vld [vmem:[%s286 + $0xa4] sm:$0x1]
        %v334 = vld [vmem:[%s286 + $0xb0] sm:$0x1]
        %v335 = vld [vmem:[%s286 + $0xbc] sm:$0x1]
        %v336 = vld [vmem:[%s286] sm:$0xe]
        %v337 = vld [vmem:[%s286 + $0xc] sm:$0xe]
        %v338 = vld [vmem:[%s286 + $0x18] sm:$0xe]
        %v339 = vld [vmem:[%s286 + $0x24] sm:$0xe]
        %v340 = vld [vmem:[%s286 + $0x30] sm:$0xe]
        %v341 = vld [vmem:[%s286 + $0x3c] sm:$0xe]
        %v342 = vld [vmem:[%s286 + $0x48] sm:$0xe]
        %v343 = vld [vmem:[%s286 + $0x54] sm:$0xe]
        %v344 = vld [vmem:[%s286 + $0x60] sm:$0xe]
        %v345 = vld [vmem:[%s286 + $0x6c] sm:$0xe]
        %v346 = vld [vmem:[%s286 + $0x78] sm:$0xe]
        %v347 = vld [vmem:[%s286 + $0x84] sm:$0xe]
        %v348 = vld [vmem:[%s286 + $0x90] sm:$0xe]
        %v349 = vld [vmem:[%s286 + $0x9c] sm:$0xe]
        %v350 = vld [vmem:[%s286 + $0xa8] sm:$0xe]
        %v351 = vld [vmem:[%s286 + $0xb4] sm:$0xe]
        %s352 = scalar_lea.vmem %s286, 12
        %v353 = vld [vmem:[%s352] sm:$0xf]
        %v354 = vld [vmem:[%s352 + $0x4] sm:$0xf]
        %v355 = vld [vmem:[%s352 + $0xc] sm:$0xf]
        %v356 = vld [vmem:[%s352 + $0x10] sm:$0xf]
        %v357 = vld [vmem:[%s352 + $0x18] sm:$0xf]
        %v358 = vld [vmem:[%s352 + $0x1c] sm:$0xf]
        %v359 = vld [vmem:[%s352 + $0x24] sm:$0xf]
        %v360 = vld [vmem:[%s352 + $0x28] sm:$0xf]
        %v361 = vld [vmem:[%s352 + $0x30] sm:$0xf]
        %v362 = vld [vmem:[%s352 + $0x34] sm:$0xf]
        %v363 = vld [vmem:[%s352 + $0x3c] sm:$0xf]
        %v364 = vld [vmem:[%s352 + $0x40] sm:$0xf]
        %v365 = vld [vmem:[%s352 + $0x48] sm:$0xf]
        %v366 = vld [vmem:[%s352 + $0x4c] sm:$0xf]
        %v367 = vld [vmem:[%s352 + $0x54] sm:$0xf]
        %v368 = vld [vmem:[%s352 + $0x58] sm:$0xf]
        %v369 = vld [vmem:[%s352 + $0x60] sm:$0xf]
        %v370 = vld [vmem:[%s352 + $0x64] sm:$0xf]
        %v371 = vld [vmem:[%s352 + $0x6c] sm:$0xf]
        %v372 = vld [vmem:[%s352 + $0x70] sm:$0xf]
        %v373 = vld [vmem:[%s352 + $0x78] sm:$0xf]
        %v374 = vld [vmem:[%s352 + $0x7c] sm:$0xf]
        %v375 = vld [vmem:[%s352 + $0x84] sm:$0xf]
        %v376 = vld [vmem:[%s352 + $0x88] sm:$0xf]
        %v377 = vld [vmem:[%s352 + $0x90] sm:$0xf]
        %v378 = vld [vmem:[%s352 + $0x94] sm:$0xf]
        %v379 = vld [vmem:[%s352 + $0x9c] sm:$0xf]
        %v380 = vld [vmem:[%s352 + $0xa0] sm:$0xf]
        %v381 = vld [vmem:[%s352 + $0xa8] sm:$0xf]
        %v382 = vld [vmem:[%s352 + $0xac] sm:$0xf]
        %v383 = vld [vmem:[%s352 + $0xb4] sm:$0xf]
        %v384 = vld [vmem:[%s352 + $0xb8] sm:$0xf]
        %v385 = vld [vmem:[%s352 + $0x8] sm:$0x1]
        %v386 = vld [vmem:[%s352 + $0x14] sm:$0x1]
        %v387 = vld [vmem:[%s352 + $0x20] sm:$0x1]
        %v388 = vld [vmem:[%s352 + $0x2c] sm:$0x1]
        %v389 = vld [vmem:[%s352 + $0x38] sm:$0x1]
        %v390 = vld [vmem:[%s352 + $0x44] sm:$0x1]
        %v391 = vld [vmem:[%s352 + $0x50] sm:$0x1]
        %v392 = vld [vmem:[%s352 + $0x5c] sm:$0x1]
        %v393 = vld [vmem:[%s352 + $0x68] sm:$0x1]
        %v394 = vld [vmem:[%s352 + $0x74] sm:$0x1]
        %v395 = vld [vmem:[%s352 + $0x80] sm:$0x1]
        %v396 = vld [vmem:[%s352 + $0x8c] sm:$0x1]
        %v397 = vld [vmem:[%s352 + $0x98] sm:$0x1]
        %v398 = vld [vmem:[%s352 + $0xa4] sm:$0x1]
        %v399 = vld [vmem:[%s352 + $0xb0] sm:$0x1]
        %v400 = vld [vmem:[%s352 + $0xbc] sm:$0x1]
        %v401 = vld [vmem:[%s352] sm:$0xe]
        %v402 = vld [vmem:[%s352 + $0xc] sm:$0xe]
        %v403 = vld [vmem:[%s352 + $0x18] sm:$0xe]
        %v404 = vld [vmem:[%s352 + $0x24] sm:$0xe]
        %v405 = vld [vmem:[%s352 + $0x30] sm:$0xe]
        %v406 = vld [vmem:[%s352 + $0x3c] sm:$0xe]
        %v407 = vld [vmem:[%s352 + $0x48] sm:$0xe]
        %v408 = vld [vmem:[%s352 + $0x54] sm:$0xe]
        %v409 = vld [vmem:[%s352 + $0x60] sm:$0xe]
        %v410 = vld [vmem:[%s352 + $0x6c] sm:$0xe]
        %v411 = vld [vmem:[%s352 + $0x78] sm:$0xe]
        %v412 = vld [vmem:[%s352 + $0x84] sm:$0xe]
        %v413 = vld [vmem:[%s352 + $0x90] sm:$0xe]
        %v414 = vld [vmem:[%s352 + $0x9c] sm:$0xe]
        %v415 = vld [vmem:[%s352 + $0xa8] sm:$0xe]
        %v416 = vld [vmem:[%s352 + $0xb4] sm:$0xe]
        %s417 = scalar_lea.vmem %s286, 24
        %v418 = vld [vmem:[%s417] sm:$0xf]
        %v419 = vld [vmem:[%s417 + $0x4] sm:$0xf]
        %v420 = vld [vmem:[%s417 + $0xc] sm:$0xf]
        %v421 = vld [vmem:[%s417 + $0x10] sm:$0xf]
        %v422 = vld [vmem:[%s417 + $0x18] sm:$0xf]
        %v423 = vld [vmem:[%s417 + $0x1c] sm:$0xf]
        %v424 = vld [vmem:[%s417 + $0x24] sm:$0xf]
        %v425 = vld [vmem:[%s417 + $0x28] sm:$0xf]
        %v426 = vld [vmem:[%s417 + $0x30] sm:$0xf]
        %v427 = vld [vmem:[%s417 + $0x34] sm:$0xf]
        %v428 = vld [vmem:[%s417 + $0x3c] sm:$0xf]
        %v429 = vld [vmem:[%s417 + $0x40] sm:$0xf]
        %v430 = vld [vmem:[%s417 + $0x48] sm:$0xf]
        %v431 = vld [vmem:[%s417 + $0x4c] sm:$0xf]
        %v432 = vld [vmem:[%s417 + $0x54] sm:$0xf]
        %v433 = vld [vmem:[%s417 + $0x58] sm:$0xf]
        %v434 = vld [vmem:[%s417 + $0x60] sm:$0xf]
        %v435 = vld [vmem:[%s417 + $0x64] sm:$0xf]
        %v436 = vld [vmem:[%s417 + $0x6c] sm:$0xf]
        %v437 = vld [vmem:[%s417 + $0x70] sm:$0xf]
        %v438 = vld [vmem:[%s417 + $0x78] sm:$0xf]
        %v439 = vld [vmem:[%s417 + $0x7c] sm:$0xf]
        %v440 = vld [vmem:[%s417 + $0x84] sm:$0xf]
        %v441 = vld [vmem:[%s417 + $0x88] sm:$0xf]
        %v442 = vld [vmem:[%s417 + $0x90] sm:$0xf]
        %v443 = vld [vmem:[%s417 + $0x94] sm:$0xf]
        %v444 = vld [vmem:[%s417 + $0x9c] sm:$0xf]
        %v445 = vld [vmem:[%s417 + $0xa0] sm:$0xf]
        %v446 = vld [vmem:[%s417 + $0xa8] sm:$0xf]
        %v447 = vld [vmem:[%s417 + $0xac] sm:$0xf]
        %v448 = vld [vmem:[%s417 + $0xb4] sm:$0xf]
        %v449 = vld [vmem:[%s417 + $0xb8] sm:$0xf]
        %v450 = vld [vmem:[%s417 + $0x8] sm:$0x1]
        %v451 = vld [vmem:[%s417 + $0x14] sm:$0x1]
        %v452 = vld [vmem:[%s417 + $0x20] sm:$0x1]
        %v453 = vld [vmem:[%s417 + $0x2c] sm:$0x1]
        %v454 = vld [vmem:[%s417 + $0x38] sm:$0x1]
        %v455 = vld [vmem:[%s417 + $0x44] sm:$0x1]
        %v456 = vld [vmem:[%s417 + $0x50] sm:$0x1]
        %v457 = vld [vmem:[%s417 + $0x5c] sm:$0x1]
        %v458 = vld [vmem:[%s417 + $0x68] sm:$0x1]
        %v459 = vld [vmem:[%s417 + $0x74] sm:$0x1]
        %v460 = vld [vmem:[%s417 + $0x80] sm:$0x1]
        %v461 = vld [vmem:[%s417 + $0x8c] sm:$0x1]
        %v462 = vld [vmem:[%s417 + $0x98] sm:$0x1]
        %v463 = vld [vmem:[%s417 + $0xa4] sm:$0x1]
        %v464 = vld [vmem:[%s417 + $0xb0] sm:$0x1]
        %v465 = vld [vmem:[%s417 + $0xbc] sm:$0x1]
        %v466 = vld [vmem:[%s417] sm:$0xe]
        %v467 = vld [vmem:[%s417 + $0xc] sm:$0xe]
        %v468 = vld [vmem:[%s417 + $0x18] sm:$0xe]
        %v469 = vld [vmem:[%s417 + $0x24] sm:$0xe]
        %v470 = vld [vmem:[%s417 + $0x30] sm:$0xe]
        %v471 = vld [vmem:[%s417 + $0x3c] sm:$0xe]
        %v472 = vld [vmem:[%s417 + $0x48] sm:$0xe]
        %v473 = vld [vmem:[%s417 + $0x54] sm:$0xe]
        %v474 = vld [vmem:[%s417 + $0x60] sm:$0xe]
        %v475 = vld [vmem:[%s417 + $0x6c] sm:$0xe]
        %v476 = vld [vmem:[%s417 + $0x78] sm:$0xe]
        %v477 = vld [vmem:[%s417 + $0x84] sm:$0xe]
        %v478 = vld [vmem:[%s417 + $0x90] sm:$0xe]
        %v479 = vld [vmem:[%s417 + $0x9c] sm:$0xe]
        %v480 = vld [vmem:[%s417 + $0xa8] sm:$0xe]
        %v481 = vld [vmem:[%s417 + $0xb4] sm:$0xe]
        %v514 = vunpack.c.l.b16 %v288
        %v515 = vunpack.c.l.b16 %v289
        %v516 = vunpack.c.l.b16 %v290
        %v517 = vunpack.c.l.b16 %v291
        %v518 = vunpack.c.l.b16 %v292
        %v519 = vunpack.c.l.b16 %v293
        %v520 = vunpack.c.l.b16 %v294
        %v521 = vunpack.c.l.b16 %v295
        %v522 = vunpack.c.l.b16 %v296
        %v523 = vunpack.c.l.b16 %v297
        %v524 = vunpack.c.l.b16 %v298
        %v525 = vunpack.c.l.b16 %v299
        %v526 = vunpack.c.l.b16 %v300
        %v527 = vunpack.c.l.b16 %v301
        %v528 = vunpack.c.l.b16 %v302
        %v529 = vunpack.c.l.b16 %v303
        %v530 = vunpack.c.l.b16 %v304
        %v531 = vunpack.c.l.b16 %v305
        %v532 = vunpack.c.l.b16 %v306
        %v533 = vunpack.c.l.b16 %v307
        %v534 = vunpack.c.l.b16 %v308
        %v535 = vunpack.c.l.b16 %v309
        %v536 = vunpack.c.l.b16 %v310
        %v537 = vunpack.c.l.b16 %v311
        %v538 = vunpack.c.l.b16 %v312
        %v539 = vunpack.c.l.b16 %v313
        %v540 = vunpack.c.l.b16 %v314
        %v541 = vunpack.c.l.b16 %v315
        %v542 = vunpack.c.l.b16 %v316
        %v543 = vunpack.c.l.b16 %v317
        %v544 = vunpack.c.l.b16 %v318
        %v545 = vunpack.c.l.b16 %v319
        %v546 = vpack.c.b16 %v515, %v514
        %v547 = vpack.c.b16 %v517, %v516
        %v548 = vpack.c.b16 %v519, %v518
        %v549 = vpack.c.b16 %v521, %v520
        %v550 = vpack.c.b16 %v523, %v522
        %v551 = vpack.c.b16 %v525, %v524
        %v552 = vpack.c.b16 %v527, %v526
        %v553 = vpack.c.b16 %v529, %v528
        %v554 = vpack.c.b16 %v531, %v530
        %v555 = vpack.c.b16 %v533, %v532
        %v556 = vpack.c.b16 %v535, %v534
        %v557 = vpack.c.b16 %v537, %v536
        %v558 = vpack.c.b16 %v539, %v538
        %v559 = vpack.c.b16 %v541, %v540
        %v560 = vpack.c.b16 %v543, %v542
        %v561 = vpack.c.b16 %v545, %v544
        %v578 = vunpack.c.l.b16 %v320
        %v579 = vunpack.c.l.b16 %v321
        %v580 = vunpack.c.l.b16 %v322
        %v581 = vunpack.c.l.b16 %v323
        %v582 = vunpack.c.l.b16 %v324
        %v583 = vunpack.c.l.b16 %v325
        %v584 = vunpack.c.l.b16 %v326
        %v585 = vunpack.c.l.b16 %v327
        %v586 = vunpack.c.l.b16 %v328
        %v587 = vunpack.c.l.b16 %v329
        %v588 = vunpack.c.l.b16 %v330
        %v589 = vunpack.c.l.b16 %v331
        %v590 = vunpack.c.l.b16 %v332
        %v591 = vunpack.c.l.b16 %v333
        %v592 = vunpack.c.l.b16 %v334
        %v593 = vunpack.c.l.b16 %v335
        %v594 = vpack.c.b16 %v578, %v578
        %v595 = vpack.c.b16 %v579, %v579
        %v596 = vpack.c.b16 %v580, %v580
        %v597 = vpack.c.b16 %v581, %v581
        %v598 = vpack.c.b16 %v582, %v582
        %v599 = vpack.c.b16 %v583, %v583
        %v600 = vpack.c.b16 %v584, %v584
        %v601 = vpack.c.b16 %v585, %v585
        %v602 = vpack.c.b16 %v586, %v586
        %v603 = vpack.c.b16 %v587, %v587
        %v604 = vpack.c.b16 %v588, %v588
        %v605 = vpack.c.b16 %v589, %v589
        %v606 = vpack.c.b16 %v590, %v590
        %v607 = vpack.c.b16 %v591, %v591
        %v608 = vpack.c.b16 %v592, %v592
        %v609 = vpack.c.b16 %v593, %v593
        %vm610 = vsmask.f32 7424
        %v612 = vshrl.u32 %v546, 16
        %v614 = vshll.u32 %v546, 16
        %v616 = vrot.slane %v614, 1
        %v617 = vor.u32 %v612, %v616
        %v619 = vshll.u32 %v594, 16
        %v621 = vrot.slane %v619, 1
        %v622 = vsel %vm610, %v617, %v621
        %v624 = vshrl.u32 %v547, 16
        %v626 = vshll.u32 %v547, 16
        %v628 = vrot.slane %v626, 1
        %v629 = vor.u32 %v624, %v628
        %v631 = vshll.u32 %v595, 16
        %v633 = vrot.slane %v631, 1
        %v634 = vsel %vm610, %v629, %v633
        %v636 = vshrl.u32 %v548, 16
        %v638 = vshll.u32 %v548, 16
        %v640 = vrot.slane %v638, 1
        %v641 = vor.u32 %v636, %v640
        %v643 = vshll.u32 %v596, 16
        %v645 = vrot.slane %v643, 1
        %v646 = vsel %vm610, %v641, %v645
        %v648 = vshrl.u32 %v549, 16
        %v650 = vshll.u32 %v549, 16
        %v652 = vrot.slane %v650, 1
        %v653 = vor.u32 %v648, %v652
        %v655 = vshll.u32 %v597, 16
        %v657 = vrot.slane %v655, 1
        %v658 = vsel %vm610, %v653, %v657
        %v660 = vshrl.u32 %v550, 16
        %v662 = vshll.u32 %v550, 16
        %v664 = vrot.slane %v662, 1
        %v665 = vor.u32 %v660, %v664
        %v667 = vshll.u32 %v598, 16
        %v669 = vrot.slane %v667, 1
        %v670 = vsel %vm610, %v665, %v669
        %v672 = vshrl.u32 %v551, 16
        %v674 = vshll.u32 %v551, 16
        %v676 = vrot.slane %v674, 1
        %v677 = vor.u32 %v672, %v676
        %v679 = vshll.u32 %v599, 16
        %v681 = vrot.slane %v679, 1
        %v682 = vsel %vm610, %v677, %v681
        %v684 = vshrl.u32 %v552, 16
        %v686 = vshll.u32 %v552, 16
        %v688 = vrot.slane %v686, 1
        %v689 = vor.u32 %v684, %v688
        %v691 = vshll.u32 %v600, 16
        %v693 = vrot.slane %v691, 1
        %v694 = vsel %vm610, %v689, %v693
        %v696 = vshrl.u32 %v553, 16
        %v698 = vshll.u32 %v553, 16
        %v700 = vrot.slane %v698, 1
        %v701 = vor.u32 %v696, %v700
        %v703 = vshll.u32 %v601, 16
        %v705 = vrot.slane %v703, 1
        %v706 = vsel %vm610, %v701, %v705
        %v708 = vshrl.u32 %v554, 16
        %v710 = vshll.u32 %v554, 16
        %v712 = vrot.slane %v710, 1
        %v713 = vor.u32 %v708, %v712
        %v715 = vshll.u32 %v602, 16
        %v717 = vrot.slane %v715, 1
        %v718 = vsel %vm610, %v713, %v717
        %v720 = vshrl.u32 %v555, 16
        %v722 = vshll.u32 %v555, 16
        %v724 = vrot.slane %v722, 1
        %v725 = vor.u32 %v720, %v724
        %v727 = vshll.u32 %v603, 16
        %v729 = vrot.slane %v727, 1
        %v730 = vsel %vm610, %v725, %v729
        %v732 = vshrl.u32 %v556, 16
        %v734 = vshll.u32 %v556, 16
        %v736 = vrot.slane %v734, 1
        %v737 = vor.u32 %v732, %v736
        %v739 = vshll.u32 %v604, 16
        %v741 = vrot.slane %v739, 1
        %v742 = vsel %vm610, %v737, %v741
        %v744 = vshrl.u32 %v557, 16
        %v746 = vshll.u32 %v557, 16
        %v748 = vrot.slane %v746, 1
        %v749 = vor.u32 %v744, %v748
        %v751 = vshll.u32 %v605, 16
        %v753 = vrot.slane %v751, 1
        %v754 = vsel %vm610, %v749, %v753
        %v756 = vshrl.u32 %v558, 16
        %v758 = vshll.u32 %v558, 16
        %v760 = vrot.slane %v758, 1
        %v761 = vor.u32 %v756, %v760
        %v763 = vshll.u32 %v606, 16
        %v765 = vrot.slane %v763, 1
        %v766 = vsel %vm610, %v761, %v765
        %v768 = vshrl.u32 %v559, 16
        %v770 = vshll.u32 %v559, 16
        %v772 = vrot.slane %v770, 1
        %v773 = vor.u32 %v768, %v772
        %v775 = vshll.u32 %v607, 16
        %v777 = vrot.slane %v775, 1
        %v778 = vsel %vm610, %v773, %v777
        %v780 = vshrl.u32 %v560, 16
        %v782 = vshll.u32 %v560, 16
        %v784 = vrot.slane %v782, 1
        %v785 = vor.u32 %v780, %v784
        %v787 = vshll.u32 %v608, 16
        %v789 = vrot.slane %v787, 1
        %v790 = vsel %vm610, %v785, %v789
        %v792 = vshrl.u32 %v561, 16
        %v794 = vshll.u32 %v561, 16
        %v796 = vrot.slane %v794, 1
        %v797 = vor.u32 %v792, %v796
        %v799 = vshll.u32 %v609, 16
        %v801 = vrot.slane %v799, 1
        %v802 = vsel %vm610, %v797, %v801
        %803 = vrot.lane.b32.xlu0 %v622, 3
        %v804 = vpop.permute.xlu0 %803
        %805 = vrot.lane.b32.xlu0 %v634, 3
        %v806 = vpop.permute.xlu0 %805
        %807 = vrot.lane.b32.xlu0 %v646, 3
        %v808 = vpop.permute.xlu0 %807
        %809 = vrot.lane.b32.xlu0 %v658, 3
        %v810 = vpop.permute.xlu0 %809
        %811 = vrot.lane.b32.xlu0 %v670, 3
        %v812 = vpop.permute.xlu0 %811
        %813 = vrot.lane.b32.xlu0 %v682, 3
        %v814 = vpop.permute.xlu0 %813
        %815 = vrot.lane.b32.xlu0 %v694, 3
        %v816 = vpop.permute.xlu0 %815
        %817 = vrot.lane.b32.xlu0 %v706, 3
        %v818 = vpop.permute.xlu0 %817
        %819 = vrot.lane.b32.xlu0 %v718, 3
        %v820 = vpop.permute.xlu0 %819
        %821 = vrot.lane.b32.xlu0 %v730, 3
        %v822 = vpop.permute.xlu0 %821
        %823 = vrot.lane.b32.xlu0 %v742, 3
        %v824 = vpop.permute.xlu0 %823
        %825 = vrot.lane.b32.xlu0 %v754, 3
        %v826 = vpop.permute.xlu0 %825
        %827 = vrot.lane.b32.xlu0 %v766, 3
        %v828 = vpop.permute.xlu0 %827
        %829 = vrot.lane.b32.xlu0 %v778, 3
        %v830 = vpop.permute.xlu0 %829
        %831 = vrot.lane.b32.xlu0 %v790, 3
        %v832 = vpop.permute.xlu0 %831
        %833 = vrot.lane.b32.xlu0 %v802, 3
        %v834 = vpop.permute.xlu0 %833
        %v851 = vunpack.c.l.b16 %v336
        %v852 = vunpack.c.l.b16 %v337
        %v853 = vunpack.c.l.b16 %v338
        %v854 = vunpack.c.l.b16 %v339
        %v855 = vunpack.c.l.b16 %v340
        %v856 = vunpack.c.l.b16 %v341
        %v857 = vunpack.c.l.b16 %v342
        %v858 = vunpack.c.l.b16 %v343
        %v859 = vunpack.c.l.b16 %v344
        %v860 = vunpack.c.l.b16 %v345
        %v861 = vunpack.c.l.b16 %v346
        %v862 = vunpack.c.l.b16 %v347
        %v863 = vunpack.c.l.b16 %v348
        %v864 = vunpack.c.l.b16 %v349
        %v865 = vunpack.c.l.b16 %v350
        %v866 = vunpack.c.l.b16 %v351
        %v867 = vpack.c.b16 %v515, %v851
        %v868 = vpack.c.b16 %v517, %v852
        %v869 = vpack.c.b16 %v519, %v853
        %v870 = vpack.c.b16 %v521, %v854
        %v871 = vpack.c.b16 %v523, %v855
        %v872 = vpack.c.b16 %v525, %v856
        %v873 = vpack.c.b16 %v527, %v857
        %v874 = vpack.c.b16 %v529, %v858
        %v875 = vpack.c.b16 %v531, %v859
        %v876 = vpack.c.b16 %v533, %v860
        %v877 = vpack.c.b16 %v535, %v861
        %v878 = vpack.c.b16 %v537, %v862
        %v879 = vpack.c.b16 %v539, %v863
        %v880 = vpack.c.b16 %v541, %v864
        %v881 = vpack.c.b16 %v543, %v865
        %v882 = vpack.c.b16 %v545, %v866
        %vm883 = vcmask 1046528
        %v884 = vrot.slane %v867, 1
        %v885 = vrot.slane %v594, 1
        %v886 = vsel %vm883, %v884, %v885
        %v887 = vrot.slane %v868, 1
        %v888 = vrot.slane %v595, 1
        %v889 = vsel %vm883, %v887, %v888
        %v890 = vrot.slane %v869, 1
        %v891 = vrot.slane %v596, 1
        %v892 = vsel %vm883, %v890, %v891
        %v893 = vrot.slane %v870, 1
        %v894 = vrot.slane %v597, 1
        %v895 = vsel %vm883, %v893, %v894
        %v896 = vrot.slane %v871, 1
        %v897 = vrot.slane %v598, 1
        %v898 = vsel %vm883, %v896, %v897
        %v899 = vrot.slane %v872, 1
        %v900 = vrot.slane %v599, 1
        %v901 = vsel %vm883, %v899, %v900
        %v902 = vrot.slane %v873, 1
        %v903 = vrot.slane %v600, 1
        %v904 = vsel %vm883, %v902, %v903
        %v905 = vrot.slane %v874, 1
        %v906 = vrot.slane %v601, 1
        %v907 = vsel %vm883, %v905, %v906
        %v908 = vrot.slane %v875, 1
        %v909 = vrot.slane %v602, 1
        %v910 = vsel %vm883, %v908, %v909
        %v911 = vrot.slane %v876, 1
        %v912 = vrot.slane %v603, 1
        %v913 = vsel %vm883, %v911, %v912
        %v914 = vrot.slane %v877, 1
        %v915 = vrot.slane %v604, 1
        %v916 = vsel %vm883, %v914, %v915
        %v917 = vrot.slane %v878, 1
        %v918 = vrot.slane %v605, 1
        %v919 = vsel %vm883, %v917, %v918
        %v920 = vrot.slane %v879, 1
        %v921 = vrot.slane %v606, 1
        %v922 = vsel %vm883, %v920, %v921
        %v923 = vrot.slane %v880, 1
        %v924 = vrot.slane %v607, 1
        %v925 = vsel %vm883, %v923, %v924
        %v926 = vrot.slane %v881, 1
        %v927 = vrot.slane %v608, 1
        %v928 = vsel %vm883, %v926, %v927
        %v929 = vrot.slane %v882, 1
        %v930 = vrot.slane %v609, 1
        %v931 = vsel %vm883, %v929, %v930
        %932 = vrot.lane.b32.xlu0 %v886, 6
        %v933 = vpop.permute.xlu0 %932
        %934 = vrot.lane.b32.xlu0 %v889, 6
        %v935 = vpop.permute.xlu0 %934
        %936 = vrot.lane.b32.xlu0 %v892, 6
        %v937 = vpop.permute.xlu0 %936
        %938 = vrot.lane.b32.xlu0 %v895, 6
        %v939 = vpop.permute.xlu0 %938
        %940 = vrot.lane.b32.xlu0 %v898, 6
        %v941 = vpop.permute.xlu0 %940
        %942 = vrot.lane.b32.xlu0 %v901, 6
        %v943 = vpop.permute.xlu0 %942
        %944 = vrot.lane.b32.xlu0 %v904, 6
        %v945 = vpop.permute.xlu0 %944
        %946 = vrot.lane.b32.xlu0 %v907, 6
        %v947 = vpop.permute.xlu0 %946
        %948 = vrot.lane.b32.xlu0 %v910, 6
        %v949 = vpop.permute.xlu0 %948
        %950 = vrot.lane.b32.xlu0 %v913, 6
        %v951 = vpop.permute.xlu0 %950
        %952 = vrot.lane.b32.xlu0 %v916, 6
        %v953 = vpop.permute.xlu0 %952
        %954 = vrot.lane.b32.xlu0 %v919, 6
        %v955 = vpop.permute.xlu0 %954
        %956 = vrot.lane.b32.xlu0 %v922, 6
        %v957 = vpop.permute.xlu0 %956
        %958 = vrot.lane.b32.xlu0 %v925, 6
        %v959 = vpop.permute.xlu0 %958
        %960 = vrot.lane.b32.xlu0 %v928, 6
        %v961 = vpop.permute.xlu0 %960
        %962 = vrot.lane.b32.xlu0 %v931, 6
        %v963 = vpop.permute.xlu0 %962
        %v996 = vunpack.c.l.b16 %v353
        %v997 = vunpack.c.l.b16 %v354
        %v998 = vunpack.c.l.b16 %v355
        %v999 = vunpack.c.l.b16 %v356
        %v1000 = vunpack.c.l.b16 %v357
        %v1001 = vunpack.c.l.b16 %v358
        %v1002 = vunpack.c.l.b16 %v359
        %v1003 = vunpack.c.l.b16 %v360
        %v1004 = vunpack.c.l.b16 %v361
        %v1005 = vunpack.c.l.b16 %v362
        %v1006 = vunpack.c.l.b16 %v363
        %v1007 = vunpack.c.l.b16 %v364
        %v1008 = vunpack.c.l.b16 %v365
        %v1009 = vunpack.c.l.b16 %v366
        %v1010 = vunpack.c.l.b16 %v367
        %v1011 = vunpack.c.l.b16 %v368
        %v1012 = vunpack.c.l.b16 %v369
        %v1013 = vunpack.c.l.b16 %v370
        %v1014 = vunpack.c.l.b16 %v371
        %v1015 = vunpack.c.l.b16 %v372
        %v1016 = vunpack.c.l.b16 %v373
        %v1017 = vunpack.c.l.b16 %v374
        %v1018 = vunpack.c.l.b16 %v375
        %v1019 = vunpack.c.l.b16 %v376
        %v1020 = vunpack.c.l.b16 %v377
        %v1021 = vunpack.c.l.b16 %v378
        %v1022 = vunpack.c.l.b16 %v379
        %v1023 = vunpack.c.l.b16 %v380
        %v1024 = vunpack.c.l.b16 %v381
        %v1025 = vunpack.c.l.b16 %v382
        %v1026 = vunpack.c.l.b16 %v383
        %v1027 = vunpack.c.l.b16 %v384
        %v1028 = vpack.c.b16 %v997, %v996
        %v1029 = vpack.c.b16 %v999, %v998
        %v1030 = vpack.c.b16 %v1001, %v1000
        %v1031 = vpack.c.b16 %v1003, %v1002
        %v1032 = vpack.c.b16 %v1005, %v1004
        %v1033 = vpack.c.b16 %v1007, %v1006
        %v1034 = vpack.c.b16 %v1009, %v1008
        %v1035 = vpack.c.b16 %v1011, %v1010
        %v1036 = vpack.c.b16 %v1013, %v1012
        %v1037 = vpack.c.b16 %v1015, %v1014
        %v1038 = vpack.c.b16 %v1017, %v1016
        %v1039 = vpack.c.b16 %v1019, %v1018
        %v1040 = vpack.c.b16 %v1021, %v1020
        %v1041 = vpack.c.b16 %v1023, %v1022
        %v1042 = vpack.c.b16 %v1025, %v1024
        %v1043 = vpack.c.b16 %v1027, %v1026
        %1044 = vrot.lane.b32.xlu0 %v1028, 9
        %v1045 = vpop.permute.xlu0 %1044
        %1046 = vrot.lane.b32.xlu0 %v1029, 9
        %v1047 = vpop.permute.xlu0 %1046
        %1048 = vrot.lane.b32.xlu0 %v1030, 9
        %v1049 = vpop.permute.xlu0 %1048
        %1050 = vrot.lane.b32.xlu0 %v1031, 9
        %v1051 = vpop.permute.xlu0 %1050
        %1052 = vrot.lane.b32.xlu0 %v1032, 9
        %v1053 = vpop.permute.xlu0 %1052
        %1054 = vrot.lane.b32.xlu0 %v1033, 9
        %v1055 = vpop.permute.xlu0 %1054
        %1056 = vrot.lane.b32.xlu0 %v1034, 9
        %v1057 = vpop.permute.xlu0 %1056
        %1058 = vrot.lane.b32.xlu0 %v1035, 9
        %v1059 = vpop.permute.xlu0 %1058
        %1060 = vrot.lane.b32.xlu0 %v1036, 9
        %v1061 = vpop.permute.xlu0 %1060
        %1062 = vrot.lane.b32.xlu0 %v1037, 9
        %v1063 = vpop.permute.xlu0 %1062
        %1064 = vrot.lane.b32.xlu0 %v1038, 9
        %v1065 = vpop.permute.xlu0 %1064
        %1066 = vrot.lane.b32.xlu0 %v1039, 9
        %v1067 = vpop.permute.xlu0 %1066
        %1068 = vrot.lane.b32.xlu0 %v1040, 9
        %v1069 = vpop.permute.xlu0 %1068
        %1070 = vrot.lane.b32.xlu0 %v1041, 9
        %v1071 = vpop.permute.xlu0 %1070
        %1072 = vrot.lane.b32.xlu0 %v1042, 9
        %v1073 = vpop.permute.xlu0 %1072
        %1074 = vrot.lane.b32.xlu0 %v1043, 9
        %v1075 = vpop.permute.xlu0 %1074
        %v1092 = vunpack.c.l.b16 %v385
        %v1093 = vunpack.c.l.b16 %v386
        %v1094 = vunpack.c.l.b16 %v387
        %v1095 = vunpack.c.l.b16 %v388
        %v1096 = vunpack.c.l.b16 %v389
        %v1097 = vunpack.c.l.b16 %v390
        %v1098 = vunpack.c.l.b16 %v391
        %v1099 = vunpack.c.l.b16 %v392
        %v1100 = vunpack.c.l.b16 %v393
        %v1101 = vunpack.c.l.b16 %v394
        %v1102 = vunpack.c.l.b16 %v395
        %v1103 = vunpack.c.l.b16 %v396
        %v1104 = vunpack.c.l.b16 %v397
        %v1105 = vunpack.c.l.b16 %v398
        %v1106 = vunpack.c.l.b16 %v399
        %v1107 = vunpack.c.l.b16 %v400
        %v1108 = vpack.c.b16 %v1092, %v1092
        %v1109 = vpack.c.b16 %v1093, %v1093
        %v1110 = vpack.c.b16 %v1094, %v1094
        %v1111 = vpack.c.b16 %v1095, %v1095
        %v1112 = vpack.c.b16 %v1096, %v1096
        %v1113 = vpack.c.b16 %v1097, %v1097
        %v1114 = vpack.c.b16 %v1098, %v1098
        %v1115 = vpack.c.b16 %v1099, %v1099
        %v1116 = vpack.c.b16 %v1100, %v1100
        %v1117 = vpack.c.b16 %v1101, %v1101
        %v1118 = vpack.c.b16 %v1102, %v1102
        %v1119 = vpack.c.b16 %v1103, %v1103
        %v1120 = vpack.c.b16 %v1104, %v1104
        %v1121 = vpack.c.b16 %v1105, %v1105
        %v1122 = vpack.c.b16 %v1106, %v1106
        %v1123 = vpack.c.b16 %v1107, %v1107
        %v1125 = vshrl.u32 %v1028, 16
        %v1127 = vshll.u32 %v1028, 16
        %v1129 = vrot.slane %v1127, 1
        %v1130 = vor.u32 %v1125, %v1129
        %v1132 = vshll.u32 %v1108, 16
        %v1134 = vrot.slane %v1132, 1
        %v1135 = vsel %vm610, %v1130, %v1134
        %v1137 = vshrl.u32 %v1029, 16
        %v1139 = vshll.u32 %v1029, 16
        %v1141 = vrot.slane %v1139, 1
        %v1142 = vor.u32 %v1137, %v1141
        %v1144 = vshll.u32 %v1109, 16
        %v1146 = vrot.slane %v1144, 1
        %v1147 = vsel %vm610, %v1142, %v1146
        %v1149 = vshrl.u32 %v1030, 16
        %v1151 = vshll.u32 %v1030, 16
        %v1153 = vrot.slane %v1151, 1
        %v1154 = vor.u32 %v1149, %v1153
        %v1156 = vshll.u32 %v1110, 16
        %v1158 = vrot.slane %v1156, 1
        %v1159 = vsel %vm610, %v1154, %v1158
        %v1161 = vshrl.u32 %v1031, 16
        %v1163 = vshll.u32 %v1031, 16
        %v1165 = vrot.slane %v1163, 1
        %v1166 = vor.u32 %v1161, %v1165
        %v1168 = vshll.u32 %v1111, 16
        %v1170 = vrot.slane %v1168, 1
        %v1171 = vsel %vm610, %v1166, %v1170
        %v1173 = vshrl.u32 %v1032, 16
        %v1175 = vshll.u32 %v1032, 16
        %v1177 = vrot.slane %v1175, 1
        %v1178 = vor.u32 %v1173, %v1177
        %v1180 = vshll.u32 %v1112, 16
        %v1182 = vrot.slane %v1180, 1
        %v1183 = vsel %vm610, %v1178, %v1182
        %v1185 = vshrl.u32 %v1033, 16
        %v1187 = vshll.u32 %v1033, 16
        %v1189 = vrot.slane %v1187, 1
        %v1190 = vor.u32 %v1185, %v1189
        %v1192 = vshll.u32 %v1113, 16
        %v1194 = vrot.slane %v1192, 1
        %v1195 = vsel %vm610, %v1190, %v1194
        %v1197 = vshrl.u32 %v1034, 16
        %v1199 = vshll.u32 %v1034, 16
        %v1201 = vrot.slane %v1199, 1
        %v1202 = vor.u32 %v1197, %v1201
        %v1204 = vshll.u32 %v1114, 16
        %v1206 = vrot.slane %v1204, 1
        %v1207 = vsel %vm610, %v1202, %v1206
        %v1209 = vshrl.u32 %v1035, 16
        %v1211 = vshll.u32 %v1035, 16
        %v1213 = vrot.slane %v1211, 1
        %v1214 = vor.u32 %v1209, %v1213
        %v1216 = vshll.u32 %v1115, 16
        %v1218 = vrot.slane %v1216, 1
        %v1219 = vsel %vm610, %v1214, %v1218
        %v1221 = vshrl.u32 %v1036, 16
        %v1223 = vshll.u32 %v1036, 16
        %v1225 = vrot.slane %v1223, 1
        %v1226 = vor.u32 %v1221, %v1225
        %v1228 = vshll.u32 %v1116, 16
        %v1230 = vrot.slane %v1228, 1
        %v1231 = vsel %vm610, %v1226, %v1230
        %v1233 = vshrl.u32 %v1037, 16
        %v1235 = vshll.u32 %v1037, 16
        %v1237 = vrot.slane %v1235, 1
        %v1238 = vor.u32 %v1233, %v1237
        %v1240 = vshll.u32 %v1117, 16
        %v1242 = vrot.slane %v1240, 1
        %v1243 = vsel %vm610, %v1238, %v1242
        %v1245 = vshrl.u32 %v1038, 16
        %v1247 = vshll.u32 %v1038, 16
        %v1249 = vrot.slane %v1247, 1
        %v1250 = vor.u32 %v1245, %v1249
        %v1252 = vshll.u32 %v1118, 16
        %v1254 = vrot.slane %v1252, 1
        %v1255 = vsel %vm610, %v1250, %v1254
        %v1257 = vshrl.u32 %v1039, 16
        %v1259 = vshll.u32 %v1039, 16
        %v1261 = vrot.slane %v1259, 1
        %v1262 = vor.u32 %v1257, %v1261
        %v1264 = vshll.u32 %v1119, 16
        %v1266 = vrot.slane %v1264, 1
        %v1267 = vsel %vm610, %v1262, %v1266
        %v1269 = vshrl.u32 %v1040, 16
        %v1271 = vshll.u32 %v1040, 16
        %v1273 = vrot.slane %v1271, 1
        %v1274 = vor.u32 %v1269, %v1273
        %v1276 = vshll.u32 %v1120, 16
        %v1278 = vrot.slane %v1276, 1
        %v1279 = vsel %vm610, %v1274, %v1278
        %v1281 = vshrl.u32 %v1041, 16
        %v1283 = vshll.u32 %v1041, 16
        %v1285 = vrot.slane %v1283, 1
        %v1286 = vor.u32 %v1281, %v1285
        %v1288 = vshll.u32 %v1121, 16
        %v1290 = vrot.slane %v1288, 1
        %v1291 = vsel %vm610, %v1286, %v1290
        %v1293 = vshrl.u32 %v1042, 16
        %v1295 = vshll.u32 %v1042, 16
        %v1297 = vrot.slane %v1295, 1
        %v1298 = vor.u32 %v1293, %v1297
        %v1300 = vshll.u32 %v1122, 16
        %v1302 = vrot.slane %v1300, 1
        %v1303 = vsel %vm610, %v1298, %v1302
        %v1305 = vshrl.u32 %v1043, 16
        %v1307 = vshll.u32 %v1043, 16
        %v1309 = vrot.slane %v1307, 1
        %v1310 = vor.u32 %v1305, %v1309
        %v1312 = vshll.u32 %v1123, 16
        %v1314 = vrot.slane %v1312, 1
        %v1315 = vsel %vm610, %v1310, %v1314
        %1316 = vrot.lane.b32.xlu0 %v1135, 12
        %v1317 = vpop.permute.xlu0 %1316
        %1318 = vrot.lane.b32.xlu0 %v1147, 12
        %v1319 = vpop.permute.xlu0 %1318
        %1320 = vrot.lane.b32.xlu0 %v1159, 12
        %v1321 = vpop.permute.xlu0 %1320
        %1322 = vrot.lane.b32.xlu0 %v1171, 12
        %v1323 = vpop.permute.xlu0 %1322
        %1324 = vrot.lane.b32.xlu0 %v1183, 12
        %v1325 = vpop.permute.xlu0 %1324
        %1326 = vrot.lane.b32.xlu0 %v1195, 12
        %v1327 = vpop.permute.xlu0 %1326
        %1328 = vrot.lane.b32.xlu0 %v1207, 12
        %v1329 = vpop.permute.xlu0 %1328
        %1330 = vrot.lane.b32.xlu0 %v1219, 12
        %v1331 = vpop.permute.xlu0 %1330
        %1332 = vrot.lane.b32.xlu0 %v1231, 12
        %v1333 = vpop.permute.xlu0 %1332
        %1334 = vrot.lane.b32.xlu0 %v1243, 12
        %v1335 = vpop.permute.xlu0 %1334
        %1336 = vrot.lane.b32.xlu0 %v1255, 12
        %v1337 = vpop.permute.xlu0 %1336
        %1338 = vrot.lane.b32.xlu0 %v1267, 12
        %v1339 = vpop.permute.xlu0 %1338
        %1340 = vrot.lane.b32.xlu0 %v1279, 12
        %v1341 = vpop.permute.xlu0 %1340
        %1342 = vrot.lane.b32.xlu0 %v1291, 12
        %v1343 = vpop.permute.xlu0 %1342
        %1344 = vrot.lane.b32.xlu0 %v1303, 12
        %v1345 = vpop.permute.xlu0 %1344
        %1346 = vrot.lane.b32.xlu0 %v1315, 12
        %v1347 = vpop.permute.xlu0 %1346
        %v1364 = vunpack.c.l.b16 %v401
        %v1365 = vunpack.c.l.b16 %v402
        %v1366 = vunpack.c.l.b16 %v403
        %v1367 = vunpack.c.l.b16 %v404
        %v1368 = vunpack.c.l.b16 %v405
        %v1369 = vunpack.c.l.b16 %v406
        %v1370 = vunpack.c.l.b16 %v407
        %v1371 = vunpack.c.l.b16 %v408
        %v1372 = vunpack.c.l.b16 %v409
        %v1373 = vunpack.c.l.b16 %v410
        %v1374 = vunpack.c.l.b16 %v411
        %v1375 = vunpack.c.l.b16 %v412
        %v1376 = vunpack.c.l.b16 %v413
        %v1377 = vunpack.c.l.b16 %v414
        %v1378 = vunpack.c.l.b16 %v415
        %v1379 = vunpack.c.l.b16 %v416
        %v1380 = vpack.c.b16 %v997, %v1364
        %v1381 = vpack.c.b16 %v999, %v1365
        %v1382 = vpack.c.b16 %v1001, %v1366
        %v1383 = vpack.c.b16 %v1003, %v1367
        %v1384 = vpack.c.b16 %v1005, %v1368
        %v1385 = vpack.c.b16 %v1007, %v1369
        %v1386 = vpack.c.b16 %v1009, %v1370
        %v1387 = vpack.c.b16 %v1011, %v1371
        %v1388 = vpack.c.b16 %v1013, %v1372
        %v1389 = vpack.c.b16 %v1015, %v1373
        %v1390 = vpack.c.b16 %v1017, %v1374
        %v1391 = vpack.c.b16 %v1019, %v1375
        %v1392 = vpack.c.b16 %v1021, %v1376
        %v1393 = vpack.c.b16 %v1023, %v1377
        %v1394 = vpack.c.b16 %v1025, %v1378
        %v1395 = vpack.c.b16 %v1027, %v1379
        %v1396 = vrot.slane %v1380, 1
        %v1397 = vrot.slane %v1108, 1
        %v1398 = vsel %vm883, %v1396, %v1397
        %v1399 = vrot.slane %v1381, 1
        %v1400 = vrot.slane %v1109, 1
        %v1401 = vsel %vm883, %v1399, %v1400
        %v1402 = vrot.slane %v1382, 1
        %v1403 = vrot.slane %v1110, 1
        %v1404 = vsel %vm883, %v1402, %v1403
        %v1405 = vrot.slane %v1383, 1
        %v1406 = vrot.slane %v1111, 1
        %v1407 = vsel %vm883, %v1405, %v1406
        %v1408 = vrot.slane %v1384, 1
        %v1409 = vrot.slane %v1112, 1
        %v1410 = vsel %vm883, %v1408, %v1409
        %v1411 = vrot.slane %v1385, 1
        %v1412 = vrot.slane %v1113, 1
        %v1413 = vsel %vm883, %v1411, %v1412
        %v1414 = vrot.slane %v1386, 1
        %v1415 = vrot.slane %v1114, 1
        %v1416 = vsel %vm883, %v1414, %v1415
        %v1417 = vrot.slane %v1387, 1
        %v1418 = vrot.slane %v1115, 1
        %v1419 = vsel %vm883, %v1417, %v1418
        %v1420 = vrot.slane %v1388, 1
        %v1421 = vrot.slane %v1116, 1
        %v1422 = vsel %vm883, %v1420, %v1421
        %v1423 = vrot.slane %v1389, 1
        %v1424 = vrot.slane %v1117, 1
        %v1425 = vsel %vm883, %v1423, %v1424
        %v1426 = vrot.slane %v1390, 1
        %v1427 = vrot.slane %v1118, 1
        %v1428 = vsel %vm883, %v1426, %v1427
        %v1429 = vrot.slane %v1391, 1
        %v1430 = vrot.slane %v1119, 1
        %v1431 = vsel %vm883, %v1429, %v1430
        %v1432 = vrot.slane %v1392, 1
        %v1433 = vrot.slane %v1120, 1
        %v1434 = vsel %vm883, %v1432, %v1433
        %v1435 = vrot.slane %v1393, 1
        %v1436 = vrot.slane %v1121, 1
        %v1437 = vsel %vm883, %v1435, %v1436
        %v1438 = vrot.slane %v1394, 1
        %v1439 = vrot.slane %v1122, 1
        %v1440 = vsel %vm883, %v1438, %v1439
        %v1441 = vrot.slane %v1395, 1
        %v1442 = vrot.slane %v1123, 1
        %v1443 = vsel %vm883, %v1441, %v1442
        %1444 = vrot.lane.b32.xlu0 %v1398, 15
        %v1445 = vpop.permute.xlu0 %1444
        %1446 = vrot.lane.b32.xlu0 %v1401, 15
        %v1447 = vpop.permute.xlu0 %1446
        %1448 = vrot.lane.b32.xlu0 %v1404, 15
        %v1449 = vpop.permute.xlu0 %1448
        %1450 = vrot.lane.b32.xlu0 %v1407, 15
        %v1451 = vpop.permute.xlu0 %1450
        %1452 = vrot.lane.b32.xlu0 %v1410, 15
        %v1453 = vpop.permute.xlu0 %1452
        %1454 = vrot.lane.b32.xlu0 %v1413, 15
        %v1455 = vpop.permute.xlu0 %1454
        %1456 = vrot.lane.b32.xlu0 %v1416, 15
        %v1457 = vpop.permute.xlu0 %1456
        %1458 = vrot.lane.b32.xlu0 %v1419, 15
        %v1459 = vpop.permute.xlu0 %1458
        %1460 = vrot.lane.b32.xlu0 %v1422, 15
        %v1461 = vpop.permute.xlu0 %1460
        %1462 = vrot.lane.b32.xlu0 %v1425, 15
        %v1463 = vpop.permute.xlu0 %1462
        %1464 = vrot.lane.b32.xlu0 %v1428, 15
        %v1465 = vpop.permute.xlu0 %1464
        %1466 = vrot.lane.b32.xlu0 %v1431, 15
        %v1467 = vpop.permute.xlu0 %1466
        %1468 = vrot.lane.b32.xlu0 %v1434, 15
        %v1469 = vpop.permute.xlu0 %1468
        %1470 = vrot.lane.b32.xlu0 %v1437, 15
        %v1471 = vpop.permute.xlu0 %1470
        %1472 = vrot.lane.b32.xlu0 %v1440, 15
        %v1473 = vpop.permute.xlu0 %1472
        %1474 = vrot.lane.b32.xlu0 %v1443, 15
        %v1475 = vpop.permute.xlu0 %1474
        %v1508 = vunpack.c.l.b16 %v418
        %v1509 = vunpack.c.l.b16 %v419
        %v1510 = vunpack.c.l.b16 %v420
        %v1511 = vunpack.c.l.b16 %v421
        %v1512 = vunpack.c.l.b16 %v422
        %v1513 = vunpack.c.l.b16 %v423
        %v1514 = vunpack.c.l.b16 %v424
        %v1515 = vunpack.c.l.b16 %v425
        %v1516 = vunpack.c.l.b16 %v426
        %v1517 = vunpack.c.l.b16 %v427
        %v1518 = vunpack.c.l.b16 %v428
        %v1519 = vunpack.c.l.b16 %v429
        %v1520 = vunpack.c.l.b16 %v430
        %v1521 = vunpack.c.l.b16 %v431
        %v1522 = vunpack.c.l.b16 %v432
        %v1523 = vunpack.c.l.b16 %v433
        %v1524 = vunpack.c.l.b16 %v434
        %v1525 = vunpack.c.l.b16 %v435
        %v1526 = vunpack.c.l.b16 %v436
        %v1527 = vunpack.c.l.b16 %v437
        %v1528 = vunpack.c.l.b16 %v438
        %v1529 = vunpack.c.l.b16 %v439
        %v1530 = vunpack.c.l.b16 %v440
        %v1531 = vunpack.c.l.b16 %v441
        %v1532 = vunpack.c.l.b16 %v442
        %v1533 = vunpack.c.l.b16 %v443
        %v1534 = vunpack.c.l.b16 %v444
        %v1535 = vunpack.c.l.b16 %v445
        %v1536 = vunpack.c.l.b16 %v446
        %v1537 = vunpack.c.l.b16 %v447
        %v1538 = vunpack.c.l.b16 %v448
        %v1539 = vunpack.c.l.b16 %v449
        %v1540 = vpack.c.b16 %v1509, %v1508
        %v1541 = vpack.c.b16 %v1511, %v1510
        %v1542 = vpack.c.b16 %v1513, %v1512
        %v1543 = vpack.c.b16 %v1515, %v1514
        %v1544 = vpack.c.b16 %v1517, %v1516
        %v1545 = vpack.c.b16 %v1519, %v1518
        %v1546 = vpack.c.b16 %v1521, %v1520
        %v1547 = vpack.c.b16 %v1523, %v1522
        %v1548 = vpack.c.b16 %v1525, %v1524
        %v1549 = vpack.c.b16 %v1527, %v1526
        %v1550 = vpack.c.b16 %v1529, %v1528
        %v1551 = vpack.c.b16 %v1531, %v1530
        %v1552 = vpack.c.b16 %v1533, %v1532
        %v1553 = vpack.c.b16 %v1535, %v1534
        %v1554 = vpack.c.b16 %v1537, %v1536
        %v1555 = vpack.c.b16 %v1539, %v1538
        %1556 = vrot.lane.b32.xlu0 %v1540, 18
        %v1557 = vpop.permute.xlu0 %1556
        %1558 = vrot.lane.b32.xlu0 %v1541, 18
        %v1559 = vpop.permute.xlu0 %1558
        %1560 = vrot.lane.b32.xlu0 %v1542, 18
        %v1561 = vpop.permute.xlu0 %1560
        %1562 = vrot.lane.b32.xlu0 %v1543, 18
        %v1563 = vpop.permute.xlu0 %1562
        %1564 = vrot.lane.b32.xlu0 %v1544, 18
        %v1565 = vpop.permute.xlu0 %1564
        %1566 = vrot.lane.b32.xlu0 %v1545, 18
        %v1567 = vpop.permute.xlu0 %1566
        %1568 = vrot.lane.b32.xlu0 %v1546, 18
        %v1569 = vpop.permute.xlu0 %1568
        %1570 = vrot.lane.b32.xlu0 %v1547, 18
        %v1571 = vpop.permute.xlu0 %1570
        %1572 = vrot.lane.b32.xlu0 %v1548, 18
        %v1573 = vpop.permute.xlu0 %1572
        %1574 = vrot.lane.b32.xlu0 %v1549, 18
        %v1575 = vpop.permute.xlu0 %1574
        %1576 = vrot.lane.b32.xlu0 %v1550, 18
        %v1577 = vpop.permute.xlu0 %1576
        %1578 = vrot.lane.b32.xlu0 %v1551, 18
        %v1579 = vpop.permute.xlu0 %1578
        %1580 = vrot.lane.b32.xlu0 %v1552, 18
        %v1581 = vpop.permute.xlu0 %1580
        %1582 = vrot.lane.b32.xlu0 %v1553, 18
        %v1583 = vpop.permute.xlu0 %1582
        %1584 = vrot.lane.b32.xlu0 %v1554, 18
        %v1585 = vpop.permute.xlu0 %1584
        %1586 = vrot.lane.b32.xlu0 %v1555, 18
        %v1587 = vpop.permute.xlu0 %1586
        %v1604 = vunpack.c.l.b16 %v450
        %v1605 = vunpack.c.l.b16 %v451
        %v1606 = vunpack.c.l.b16 %v452
        %v1607 = vunpack.c.l.b16 %v453
        %v1608 = vunpack.c.l.b16 %v454
        %v1609 = vunpack.c.l.b16 %v455
        %v1610 = vunpack.c.l.b16 %v456
        %v1611 = vunpack.c.l.b16 %v457
        %v1612 = vunpack.c.l.b16 %v458
        %v1613 = vunpack.c.l.b16 %v459
        %v1614 = vunpack.c.l.b16 %v460
        %v1615 = vunpack.c.l.b16 %v461
        %v1616 = vunpack.c.l.b16 %v462
        %v1617 = vunpack.c.l.b16 %v463
        %v1618 = vunpack.c.l.b16 %v464
        %v1619 = vunpack.c.l.b16 %v465
        %v1620 = vpack.c.b16 %v1604, %v1604
        %v1621 = vpack.c.b16 %v1605, %v1605
        %v1622 = vpack.c.b16 %v1606, %v1606
        %v1623 = vpack.c.b16 %v1607, %v1607
        %v1624 = vpack.c.b16 %v1608, %v1608
        %v1625 = vpack.c.b16 %v1609, %v1609
        %v1626 = vpack.c.b16 %v1610, %v1610
        %v1627 = vpack.c.b16 %v1611, %v1611
        %v1628 = vpack.c.b16 %v1612, %v1612
        %v1629 = vpack.c.b16 %v1613, %v1613
        %v1630 = vpack.c.b16 %v1614, %v1614
        %v1631 = vpack.c.b16 %v1615, %v1615
        %v1632 = vpack.c.b16 %v1616, %v1616
        %v1633 = vpack.c.b16 %v1617, %v1617
        %v1634 = vpack.c.b16 %v1618, %v1618
        %v1635 = vpack.c.b16 %v1619, %v1619
        %v1637 = vshrl.u32 %v1540, 16
        %v1639 = vshll.u32 %v1540, 16
        %v1641 = vrot.slane %v1639, 1
        %v1642 = vor.u32 %v1637, %v1641
        %v1644 = vshll.u32 %v1620, 16
        %v1646 = vrot.slane %v1644, 1
        %v1647 = vsel %vm610, %v1642, %v1646
        %v1649 = vshrl.u32 %v1541, 16
        %v1651 = vshll.u32 %v1541, 16
        %v1653 = vrot.slane %v1651, 1
        %v1654 = vor.u32 %v1649, %v1653
        %v1656 = vshll.u32 %v1621, 16
        %v1658 = vrot.slane %v1656, 1
        %v1659 = vsel %vm610, %v1654, %v1658
        %v1661 = vshrl.u32 %v1542, 16
        %v1663 = vshll.u32 %v1542, 16
        %v1665 = vrot.slane %v1663, 1
        %v1666 = vor.u32 %v1661, %v1665
        %v1668 = vshll.u32 %v1622, 16
        %v1670 = vrot.slane %v1668, 1
        %v1671 = vsel %vm610, %v1666, %v1670
        %v1673 = vshrl.u32 %v1543, 16
        %v1675 = vshll.u32 %v1543, 16
        %v1677 = vrot.slane %v1675, 1
        %v1678 = vor.u32 %v1673, %v1677
        %v1680 = vshll.u32 %v1623, 16
        %v1682 = vrot.slane %v1680, 1
        %v1683 = vsel %vm610, %v1678, %v1682
        %v1685 = vshrl.u32 %v1544, 16
        %v1687 = vshll.u32 %v1544, 16
        %v1689 = vrot.slane %v1687, 1
        %v1690 = vor.u32 %v1685, %v1689
        %v1692 = vshll.u32 %v1624, 16
        %v1694 = vrot.slane %v1692, 1
        %v1695 = vsel %vm610, %v1690, %v1694
        %v1697 = vshrl.u32 %v1545, 16
        %v1699 = vshll.u32 %v1545, 16
        %v1701 = vrot.slane %v1699, 1
        %v1702 = vor.u32 %v1697, %v1701
        %v1704 = vshll.u32 %v1625, 16
        %v1706 = vrot.slane %v1704, 1
        %v1707 = vsel %vm610, %v1702, %v1706
        %v1709 = vshrl.u32 %v1546, 16
        %v1711 = vshll.u32 %v1546, 16
        %v1713 = vrot.slane %v1711, 1
        %v1714 = vor.u32 %v1709, %v1713
        %v1716 = vshll.u32 %v1626, 16
        %v1718 = vrot.slane %v1716, 1
        %v1719 = vsel %vm610, %v1714, %v1718
        %v1721 = vshrl.u32 %v1547, 16
        %v1723 = vshll.u32 %v1547, 16
        %v1725 = vrot.slane %v1723, 1
        %v1726 = vor.u32 %v1721, %v1725
        %v1728 = vshll.u32 %v1627, 16
        %v1730 = vrot.slane %v1728, 1
        %v1731 = vsel %vm610, %v1726, %v1730
        %v1733 = vshrl.u32 %v1548, 16
        %v1735 = vshll.u32 %v1548, 16
        %v1737 = vrot.slane %v1735, 1
        %v1738 = vor.u32 %v1733, %v1737
        %v1740 = vshll.u32 %v1628, 16
        %v1742 = vrot.slane %v1740, 1
        %v1743 = vsel %vm610, %v1738, %v1742
        %v1745 = vshrl.u32 %v1549, 16
        %v1747 = vshll.u32 %v1549, 16
        %v1749 = vrot.slane %v1747, 1
        %v1750 = vor.u32 %v1745, %v1749
        %v1752 = vshll.u32 %v1629, 16
        %v1754 = vrot.slane %v1752, 1
        %v1755 = vsel %vm610, %v1750, %v1754
        %v1757 = vshrl.u32 %v1550, 16
        %v1759 = vshll.u32 %v1550, 16
        %v1761 = vrot.slane %v1759, 1
        %v1762 = vor.u32 %v1757, %v1761
        %v1764 = vshll.u32 %v1630, 16
        %v1766 = vrot.slane %v1764, 1
        %v1767 = vsel %vm610, %v1762, %v1766
        %v1769 = vshrl.u32 %v1551, 16
        %v1771 = vshll.u32 %v1551, 16
        %v1773 = vrot.slane %v1771, 1
        %v1774 = vor.u32 %v1769, %v1773
        %v1776 = vshll.u32 %v1631, 16
        %v1778 = vrot.slane %v1776, 1
        %v1779 = vsel %vm610, %v1774, %v1778
        %v1781 = vshrl.u32 %v1552, 16
        %v1783 = vshll.u32 %v1552, 16
        %v1785 = vrot.slane %v1783, 1
        %v1786 = vor.u32 %v1781, %v1785
        %v1788 = vshll.u32 %v1632, 16
        %v1790 = vrot.slane %v1788, 1
        %v1791 = vsel %vm610, %v1786, %v1790
        %v1793 = vshrl.u32 %v1553, 16
        %v1795 = vshll.u32 %v1553, 16
        %v1797 = vrot.slane %v1795, 1
        %v1798 = vor.u32 %v1793, %v1797
        %v1800 = vshll.u32 %v1633, 16
        %v1802 = vrot.slane %v1800, 1
        %v1803 = vsel %vm610, %v1798, %v1802
        %v1805 = vshrl.u32 %v1554, 16
        %v1807 = vshll.u32 %v1554, 16
        %v1809 = vrot.slane %v1807, 1
        %v1810 = vor.u32 %v1805, %v1809
        %v1812 = vshll.u32 %v1634, 16
        %v1814 = vrot.slane %v1812, 1
        %v1815 = vsel %vm610, %v1810, %v1814
        %v1817 = vshrl.u32 %v1555, 16
        %v1819 = vshll.u32 %v1555, 16
        %v1821 = vrot.slane %v1819, 1
        %v1822 = vor.u32 %v1817, %v1821
        %v1824 = vshll.u32 %v1635, 16
        %v1826 = vrot.slane %v1824, 1
        %v1827 = vsel %vm610, %v1822, %v1826
        %1828 = vrot.lane.b32.xlu0 %v1647, 21
        %v1829 = vpop.permute.xlu0 %1828
        %1830 = vrot.lane.b32.xlu0 %v1659, 21
        %v1831 = vpop.permute.xlu0 %1830
        %1832 = vrot.lane.b32.xlu0 %v1671, 21
        %v1833 = vpop.permute.xlu0 %1832
        %1834 = vrot.lane.b32.xlu0 %v1683, 21
        %v1835 = vpop.permute.xlu0 %1834
        %1836 = vrot.lane.b32.xlu0 %v1695, 21
        %v1837 = vpop.permute.xlu0 %1836
        %1838 = vrot.lane.b32.xlu0 %v1707, 21
        %v1839 = vpop.permute.xlu0 %1838
        %1840 = vrot.lane.b32.xlu0 %v1719, 21
        %v1841 = vpop.permute.xlu0 %1840
        %1842 = vrot.lane.b32.xlu0 %v1731, 21
        %v1843 = vpop.permute.xlu0 %1842
        %1844 = vrot.lane.b32.xlu0 %v1743, 21
        %v1845 = vpop.permute.xlu0 %1844
        %1846 = vrot.lane.b32.xlu0 %v1755, 21
        %v1847 = vpop.permute.xlu0 %1846
        %1848 = vrot.lane.b32.xlu0 %v1767, 21
        %v1849 = vpop.permute.xlu0 %1848
        %1850 = vrot.lane.b32.xlu0 %v1779, 21
        %v1851 = vpop.permute.xlu0 %1850
        %1852 = vrot.lane.b32.xlu0 %v1791, 21
        %v1853 = vpop.permute.xlu0 %1852
        %1854 = vrot.lane.b32.xlu0 %v1803, 21
        %v1855 = vpop.permute.xlu0 %1854
        %1856 = vrot.lane.b32.xlu0 %v1815, 21
        %v1857 = vpop.permute.xlu0 %1856
        %1858 = vrot.lane.b32.xlu0 %v1827, 21
        %v1859 = vpop.permute.xlu0 %1858
        %v1876 = vunpack.c.l.b16 %v466
        %v1877 = vunpack.c.l.b16 %v467
        %v1878 = vunpack.c.l.b16 %v468
        %v1879 = vunpack.c.l.b16 %v469
        %v1880 = vunpack.c.l.b16 %v470
        %v1881 = vunpack.c.l.b16 %v471
        %v1882 = vunpack.c.l.b16 %v472
        %v1883 = vunpack.c.l.b16 %v473
        %v1884 = vunpack.c.l.b16 %v474
        %v1885 = vunpack.c.l.b16 %v475
        %v1886 = vunpack.c.l.b16 %v476
        %v1887 = vunpack.c.l.b16 %v477
        %v1888 = vunpack.c.l.b16 %v478
        %v1889 = vunpack.c.l.b16 %v479
        %v1890 = vunpack.c.l.b16 %v480
        %v1891 = vunpack.c.l.b16 %v481
        %v1892 = vpack.c.b16 %v1509, %v1876
        %v1893 = vpack.c.b16 %v1511, %v1877
        %v1894 = vpack.c.b16 %v1513, %v1878
        %v1895 = vpack.c.b16 %v1515, %v1879
        %v1896 = vpack.c.b16 %v1517, %v1880
        %v1897 = vpack.c.b16 %v1519, %v1881
        %v1898 = vpack.c.b16 %v1521, %v1882
        %v1899 = vpack.c.b16 %v1523, %v1883
        %v1900 = vpack.c.b16 %v1525, %v1884
        %v1901 = vpack.c.b16 %v1527, %v1885
        %v1902 = vpack.c.b16 %v1529, %v1886
        %v1903 = vpack.c.b16 %v1531, %v1887
        %v1904 = vpack.c.b16 %v1533, %v1888
        %v1905 = vpack.c.b16 %v1535, %v1889
        %v1906 = vpack.c.b16 %v1537, %v1890
        %v1907 = vpack.c.b16 %v1539, %v1891
        %v1908 = vrot.slane %v1892, 1
        %v1909 = vrot.slane %v1620, 1
        %v1910 = vsel %vm883, %v1908, %v1909
        %v1911 = vrot.slane %v1893, 1
        %v1912 = vrot.slane %v1621, 1
        %v1913 = vsel %vm883, %v1911, %v1912
        %v1914 = vrot.slane %v1894, 1
        %v1915 = vrot.slane %v1622, 1
        %v1916 = vsel %vm883, %v1914, %v1915
        %v1917 = vrot.slane %v1895, 1
        %v1918 = vrot.slane %v1623, 1
        %v1919 = vsel %vm883, %v1917, %v1918
        %v1920 = vrot.slane %v1896, 1
        %v1921 = vrot.slane %v1624, 1
        %v1922 = vsel %vm883, %v1920, %v1921
        %v1923 = vrot.slane %v1897, 1
        %v1924 = vrot.slane %v1625, 1
        %v1925 = vsel %vm883, %v1923, %v1924
        %v1926 = vrot.slane %v1898, 1
        %v1927 = vrot.slane %v1626, 1
        %v1928 = vsel %vm883, %v1926, %v1927
        %v1929 = vrot.slane %v1899, 1
        %v1930 = vrot.slane %v1627, 1
        %v1931 = vsel %vm883, %v1929, %v1930
        %v1932 = vrot.slane %v1900, 1
        %v1933 = vrot.slane %v1628, 1
        %v1934 = vsel %vm883, %v1932, %v1933
        %v1935 = vrot.slane %v1901, 1
        %v1936 = vrot.slane %v1629, 1
        %v1937 = vsel %vm883, %v1935, %v1936
        %v1938 = vrot.slane %v1902, 1
        %v1939 = vrot.slane %v1630, 1
        %v1940 = vsel %vm883, %v1938, %v1939
        %v1941 = vrot.slane %v1903, 1
        %v1942 = vrot.slane %v1631, 1
        %v1943 = vsel %vm883, %v1941, %v1942
        %v1944 = vrot.slane %v1904, 1
        %v1945 = vrot.slane %v1632, 1
        %v1946 = vsel %vm883, %v1944, %v1945
        %v1947 = vrot.slane %v1905, 1
        %v1948 = vrot.slane %v1633, 1
        %v1949 = vsel %vm883, %v1947, %v1948
        %v1950 = vrot.slane %v1906, 1
        %v1951 = vrot.slane %v1634, 1
        %v1952 = vsel %vm883, %v1950, %v1951
        %v1953 = vrot.slane %v1907, 1
        %v1954 = vrot.slane %v1635, 1
        %v1955 = vsel %vm883, %v1953, %v1954
        %1956 = vrot.lane.b32.xlu0 %v1910, 24
        %v1957 = vpop.permute.xlu0 %1956
        %1958 = vrot.lane.b32.xlu0 %v1913, 24
        %v1959 = vpop.permute.xlu0 %1958
        %1960 = vrot.lane.b32.xlu0 %v1916, 24
        %v1961 = vpop.permute.xlu0 %1960
        %1962 = vrot.lane.b32.xlu0 %v1919, 24
        %v1963 = vpop.permute.xlu0 %1962
        %1964 = vrot.lane.b32.xlu0 %v1922, 24
        %v1965 = vpop.permute.xlu0 %1964
        %1966 = vrot.lane.b32.xlu0 %v1925, 24
        %v1967 = vpop.permute.xlu0 %1966
        %1968 = vrot.lane.b32.xlu0 %v1928, 24
        %v1969 = vpop.permute.xlu0 %1968
        %1970 = vrot.lane.b32.xlu0 %v1931, 24
        %v1971 = vpop.permute.xlu0 %1970
        %1972 = vrot.lane.b32.xlu0 %v1934, 24
        %v1973 = vpop.permute.xlu0 %1972
        %1974 = vrot.lane.b32.xlu0 %v1937, 24
        %v1975 = vpop.permute.xlu0 %1974
        %1976 = vrot.lane.b32.xlu0 %v1940, 24
        %v1977 = vpop.permute.xlu0 %1976
        %1978 = vrot.lane.b32.xlu0 %v1943, 24
        %v1979 = vpop.permute.xlu0 %1978
        %1980 = vrot.lane.b32.xlu0 %v1946, 24
        %v1981 = vpop.permute.xlu0 %1980
        %1982 = vrot.lane.b32.xlu0 %v1949, 24
        %v1983 = vpop.permute.xlu0 %1982
        %1984 = vrot.lane.b32.xlu0 %v1952, 24
        %v1985 = vpop.permute.xlu0 %1984
        %1986 = vrot.lane.b32.xlu0 %v1955, 24
        %v1987 = vpop.permute.xlu0 %1986
        %vm1988 = vcmask 23552
        %v1990 = vsel %vm1988, %v546, %v804
        %v1992 = vsel %vm1988, %v547, %v806
        %v1994 = vsel %vm1988, %v548, %v808
        %v1996 = vsel %vm1988, %v549, %v810
        %v1998 = vsel %vm1988, %v550, %v812
        %v2000 = vsel %vm1988, %v551, %v814
        %v2002 = vsel %vm1988, %v552, %v816
        %v2004 = vsel %vm1988, %v553, %v818
        %v2006 = vsel %vm1988, %v554, %v820
        %v2008 = vsel %vm1988, %v555, %v822
        %v2010 = vsel %vm1988, %v556, %v824
        %v2012 = vsel %vm1988, %v557, %v826
        %v2014 = vsel %vm1988, %v558, %v828
        %v2016 = vsel %vm1988, %v559, %v830
        %v2018 = vsel %vm1988, %v560, %v832
        %v2020 = vsel %vm1988, %v561, %v834
        %vm2021 = vcmask 48128
        %v2023 = vsel %vm2021, %v1990, %v933
        %v2025 = vsel %vm2021, %v1992, %v935
        %v2027 = vsel %vm2021, %v1994, %v937
        %v2029 = vsel %vm2021, %v1996, %v939
        %v2031 = vsel %vm2021, %v1998, %v941
        %v2033 = vsel %vm2021, %v2000, %v943
        %v2035 = vsel %vm2021, %v2002, %v945
        %v2037 = vsel %vm2021, %v2004, %v947
        %v2039 = vsel %vm2021, %v2006, %v949
        %v2041 = vsel %vm2021, %v2008, %v951
        %v2043 = vsel %vm2021, %v2010, %v953
        %v2045 = vsel %vm2021, %v2012, %v955
        %v2047 = vsel %vm2021, %v2014, %v957
        %v2049 = vsel %vm2021, %v2016, %v959
        %v2051 = vsel %vm2021, %v2018, %v961
        %v2053 = vsel %vm2021, %v2020, %v963
        %vm2054 = vcmask 72704
        %v2056 = vsel %vm2054, %v2023, %v1045
        %v2058 = vsel %vm2054, %v2025, %v1047
        %v2060 = vsel %vm2054, %v2027, %v1049
        %v2062 = vsel %vm2054, %v2029, %v1051
        %v2064 = vsel %vm2054, %v2031, %v1053
        %v2066 = vsel %vm2054, %v2033, %v1055
        %v2068 = vsel %vm2054, %v2035, %v1057
        %v2070 = vsel %vm2054, %v2037, %v1059
        %v2072 = vsel %vm2054, %v2039, %v1061
        %v2074 = vsel %vm2054, %v2041, %v1063
        %v2076 = vsel %vm2054, %v2043, %v1065
        %v2078 = vsel %vm2054, %v2045, %v1067
        %v2080 = vsel %vm2054, %v2047, %v1069
        %v2082 = vsel %vm2054, %v2049, %v1071
        %v2084 = vsel %vm2054, %v2051, %v1073
        %v2086 = vsel %vm2054, %v2053, %v1075
        %vm2087 = vcmask 97280
        %v2089 = vsel %vm2087, %v2056, %v1317
        %v2091 = vsel %vm2087, %v2058, %v1319
        %v2093 = vsel %vm2087, %v2060, %v1321
        %v2095 = vsel %vm2087, %v2062, %v1323
        %v2097 = vsel %vm2087, %v2064, %v1325
        %v2099 = vsel %vm2087, %v2066, %v1327
        %v2101 = vsel %vm2087, %v2068, %v1329
        %v2103 = vsel %vm2087, %v2070, %v1331
        %v2105 = vsel %vm2087, %v2072, %v1333
        %v2107 = vsel %vm2087, %v2074, %v1335
        %v2109 = vsel %vm2087, %v2076, %v1337
        %v2111 = vsel %vm2087, %v2078, %v1339
        %v2113 = vsel %vm2087, %v2080, %v1341
        %v2115 = vsel %vm2087, %v2082, %v1343
        %v2117 = vsel %vm2087, %v2084, %v1345
        %v2119 = vsel %vm2087, %v2086, %v1347
        %vm2120 = vcmask 121856
        %v2122 = vsel %vm2120, %v2089, %v1445
        %v2124 = vsel %vm2120, %v2091, %v1447
        %v2126 = vsel %vm2120, %v2093, %v1449
        %v2128 = vsel %vm2120, %v2095, %v1451
        %v2130 = vsel %vm2120, %v2097, %v1453
        %v2132 = vsel %vm2120, %v2099, %v1455
        %v2134 = vsel %vm2120, %v2101, %v1457
        %v2136 = vsel %vm2120, %v2103, %v1459
        %v2138 = vsel %vm2120, %v2105, %v1461
        %v2140 = vsel %vm2120, %v2107, %v1463
        %v2142 = vsel %vm2120, %v2109, %v1465
        %v2144 = vsel %vm2120, %v2111, %v1467
        %v2146 = vsel %vm2120, %v2113, %v1469
        %v2148 = vsel %vm2120, %v2115, %v1471
        %v2150 = vsel %vm2120, %v2117, %v1473
        %v2152 = vsel %vm2120, %v2119, %v1475
        %vm2153 = vcmask 146432
        %v2155 = vsel %vm2153, %v2122, %v1557
        %v2157 = vsel %vm2153, %v2124, %v1559
        %v2159 = vsel %vm2153, %v2126, %v1561
        %v2161 = vsel %vm2153, %v2128, %v1563
        %v2163 = vsel %vm2153, %v2130, %v1565
        %v2165 = vsel %vm2153, %v2132, %v1567
        %v2167 = vsel %vm2153, %v2134, %v1569
        %v2169 = vsel %vm2153, %v2136, %v1571
        %v2171 = vsel %vm2153, %v2138, %v1573
        %v2173 = vsel %vm2153, %v2140, %v1575
        %v2175 = vsel %vm2153, %v2142, %v1577
        %v2177 = vsel %vm2153, %v2144, %v1579
        %v2179 = vsel %vm2153, %v2146, %v1581
        %v2181 = vsel %vm2153, %v2148, %v1583
        %v2183 = vsel %vm2153, %v2150, %v1585
        %v2185 = vsel %vm2153, %v2152, %v1587
        %vm2186 = vcmask 171008
        %v2188 = vsel %vm2186, %v2155, %v1829
        %v2190 = vsel %vm2186, %v2157, %v1831
        %v2192 = vsel %vm2186, %v2159, %v1833
        %v2194 = vsel %vm2186, %v2161, %v1835
        %v2196 = vsel %vm2186, %v2163, %v1837
        %v2198 = vsel %vm2186, %v2165, %v1839
        %v2200 = vsel %vm2186, %v2167, %v1841
        %v2202 = vsel %vm2186, %v2169, %v1843
        %v2204 = vsel %vm2186, %v2171, %v1845
        %v2206 = vsel %vm2186, %v2173, %v1847
        %v2208 = vsel %vm2186, %v2175, %v1849
        %v2210 = vsel %vm2186, %v2177, %v1851
        %v2212 = vsel %vm2186, %v2179, %v1853
        %v2214 = vsel %vm2186, %v2181, %v1855
        %v2216 = vsel %vm2186, %v2183, %v1857
        %v2218 = vsel %vm2186, %v2185, %v1859
        %vm2219 = vcmask 195584
        %v2221 = vsel %vm2219, %v2188, %v1957
        %v2223 = vsel %vm2219, %v2190, %v1959
        %v2225 = vsel %vm2219, %v2192, %v1961
        %v2227 = vsel %vm2219, %v2194, %v1963
        %v2229 = vsel %vm2219, %v2196, %v1965
        %v2231 = vsel %vm2219, %v2198, %v1967
        %v2233 = vsel %vm2219, %v2200, %v1969
        %v2235 = vsel %vm2219, %v2202, %v1971
        %v2237 = vsel %vm2219, %v2204, %v1973
        %v2239 = vsel %vm2219, %v2206, %v1975
        %v2241 = vsel %vm2219, %v2208, %v1977
        %v2243 = vsel %vm2219, %v2210, %v1979
        %v2245 = vsel %vm2219, %v2212, %v1981
        %v2247 = vsel %vm2219, %v2214, %v1983
        %v2249 = vsel %vm2219, %v2216, %v1985
        %v2251 = vsel %vm2219, %v2218, %v1987
        %v2252 = vld [vmem:[%s1] sm:$0xf]
        %v2253 = vld [vmem:[%s1 + $0x4] sm:$0xf]
        %v2254 = vld [vmem:[%s1 + $0x8] sm:$0xf]
        %v2255 = vld [vmem:[%s1 + $0xc] sm:$0x3]
        %v2256 = vld [vmem:[%s2] sm:$0x1]
        %v2258 = vlaneseq
        %v2259 = vshrl.u32 %v2258, 7
        %v2260 = vsub.s32 0, %v2259
        %v2261 = vrot.slane %v2256, %v2260
        %v2267 = vunpack.c.l.b16 %v2252
        %v2268 = vunpack.c.l.b16 %v2253
        %v2269 = vunpack.c.l.b16 %v2254
        %v2270 = vunpack.c.l.b16 %v2255
        %v2271 = vpack.c.b16 %v2268, %v2267
        %v2272 = vpack.c.b16 %v2270, %v2269
        %vm2274 = vcmask 220160
        %v2275 = vsel %vm2274, %v2221, 0
        %v2277 = vsel %vm2274, %v2223, 0
        %v2279 = vsel %vm2274, %v2225, 0
        %v2281 = vsel %vm2274, %v2227, 0
        %v2283 = vsel %vm2274, %v2229, 0
        %v2285 = vsel %vm2274, %v2231, 0
        %v2287 = vsel %vm2274, %v2233, 0
        %v2289 = vsel %vm2274, %v2235, 0
        %v2291 = vsel %vm2274, %v2237, 0
        %v2293 = vsel %vm2274, %v2239, 0
        %v2295 = vsel %vm2274, %v2241, 0
        %v2297 = vsel %vm2274, %v2243, 0
        %v2299 = vsel %vm2274, %v2245, 0
        %v2301 = vsel %vm2274, %v2247, 0
        %v2303 = vsel %vm2274, %v2249, 0
        %v2305 = vsel %vm2274, %v2251, 0
        %vm2307 = vcmask 1044480
        %vm2308 = vcmask 1045504
        %v2309 = vsel %vm2307, 4294967295, 65535
        %v2310 = vsel %vm2308, %v2309, 0
        %v2312 = vand.u32 %v2272, %v2310
        %2314 = vmatprep.subr.bf16.mxu0 0
        %2315 = vmatpush1.bf16.msra.mxu0 %v2271
        %2316 = vmatprep.subr.bf16.mxu0 0
        %2317 = vmatpush1.bf16.msra.mxu0 %v2312
        %2318 = vmatprep.subr.bf16.mxu0 0
        %2319 = vmatpush1.bf16.msra.mxu0 0
        %2320 = vmatprep.subr.bf16.mxu0 0
        %2321 = vmatpush1.bf16.msra.mxu0 0
        %2322 = vmatprep.subr.bf16.mxu0 0
        %2323 = vmatpush1.bf16.msra.mxu0 0
        %2324 = vmatprep.subr.bf16.mxu0 0
        %2325 = vmatpush1.bf16.msra.mxu0 0
        %2326 = vmatprep.subr.bf16.mxu0 0
        %2327 = vmatpush1.bf16.msra.mxu0 0
        %2328 = vmatprep.subr.bf16.mxu0 0
        %2329 = vmatpush1.bf16.msra.mxu0 0
        %2330 = vmatprep.subr.bf16.mxu0 0
        %2331 = vmatpush1.bf16.msra.mxu0 0
        %2332 = vmatprep.subr.bf16.mxu0 0
        %2333 = vmatpush1.bf16.msra.mxu0 0
        %2334 = vmatprep.subr.bf16.mxu0 0
        %2335 = vmatpush1.bf16.msra.mxu0 0
        %2336 = vmatprep.subr.bf16.mxu0 0
        %2337 = vmatpush1.bf16.msra.mxu0 0
        %2338 = vmatprep.subr.bf16.mxu0 0
        %2339 = vmatpush1.bf16.msra.mxu0 0
        %2340 = vmatprep.subr.bf16.mxu0 0
        %2341 = vmatpush1.bf16.msra.mxu0 0
        %2342 = vmatprep.subr.bf16.mxu0 0
        %2343 = vmatpush1.bf16.msra.mxu0 0
        %2344 = vmatprep.subr.bf16.mxu0 0
        %2345 = vmatpush1.bf16.msra.mxu0 0
        %2346 = vmatprep.mubr.bf16.mxu0 0
        %2347 = vmatmul.mubr.bf16.gmra.mrb[0].mxu0 %v2275
        %v2348 = vpop.f32.mrb[0].mxu0
        %v2349 = vadd.f32 %v2261, %v2348
        %v2350 = vpop.f32.mrb[0].mxu0
        %v2351 = vpop.f32.mrb[0].mxu0
        %v2352 = vadd.f32 %v2261, %v2351
        %v2353 = vpop.f32.mrb[0].mxu0
        %2354 = vmatprep.mubr.bf16.mxu0 0
        %2355 = vmatmul.mubr.bf16.gmra.mrb[0].mxu0 %v2277
        %v2356 = vpop.f32.mrb[0].mxu0
        %v2357 = vadd.f32 %v2261, %v2356
        %v2358 = vpop.f32.mrb[0].mxu0
        %v2359 = vpop.f32.mrb[0].mxu0
        %v2360 = vadd.f32 %v2261, %v2359
        %v2361 = vpop.f32.mrb[0].mxu0
        %2362 = vmatprep.mubr.bf16.mxu0 0
        %2363 = vmatmul.mubr.bf16.gmra.mrb[0].mxu0 %v2279
        %v2364 = vpop.f32.mrb[0].mxu0
        %v2365 = vadd.f32 %v2261, %v2364
        %v2366 = vpop.f32.mrb[0].mxu0
        %v2367 = vpop.f32.mrb[0].mxu0
        %v2368 = vadd.f32 %v2261, %v2367
        %v2369 = vpop.f32.mrb[0].mxu0
        %2370 = vmatprep.mubr.bf16.mxu0 0
        %2371 = vmatmul.mubr.bf16.gmra.mrb[0].mxu0 %v2281
        %v2372 = vpop.f32.mrb[0].mxu0
        %v2373 = vadd.f32 %v2261, %v2372
        %v2374 = vpop.f32.mrb[0].mxu0
        %v2375 = vpop.f32.mrb[0].mxu0
        %v2376 = vadd.f32 %v2261, %v2375
        %v2377 = vpop.f32.mrb[0].mxu0
        %2378 = vmatprep.mubr.bf16.mxu0 0
        %2379 = vmatmul.mubr.bf16.gmra.mrb[0].mxu0 %v2283
        %v2380 = vpop.f32.mrb[0].mxu0
        %v2381 = vadd.f32 %v2261, %v2380
        %v2382 = vpop.f32.mrb[0].mxu0
        %v2383 = vpop.f32.mrb[0].mxu0
        %v2384 = vadd.f32 %v2261, %v2383
        %v2385 = vpop.f32.mrb[0].mxu0
        %2386 = vmatprep.mubr.bf16.mxu0 0
        %2387 = vmatmul.mubr.bf16.gmra.mrb[0].mxu0 %v2285
        %v2388 = vpop.f32.mrb[0].mxu0
        %v2389 = vadd.f32 %v2261, %v2388
        %v2390 = vpop.f32.mrb[0].mxu0
        %v2391 = vpop.f32.mrb[0].mxu0
        %v2392 = vadd.f32 %v2261, %v2391
        %v2393 = vpop.f32.mrb[0].mxu0
        %2394 = vmatprep.mubr.bf16.mxu0 0
        %2395 = vmatmul.mubr.bf16.gmra.mrb[0].mxu0 %v2287
        %v2396 = vpop.f32.mrb[0].mxu0
        %v2397 = vadd.f32 %v2261, %v2396
        %v2398 = vpop.f32.mrb[0].mxu0
        %v2399 = vpop.f32.mrb[0].mxu0
        %v2400 = vadd.f32 %v2261, %v2399
        %v2401 = vpop.f32.mrb[0].mxu0
        %2402 = vmatprep.mubr.bf16.mxu0 0
        %2403 = vmatmul.mubr.bf16.gmra.mrb[0].mxu0 %v2289
        %v2404 = vpop.f32.mrb[0].mxu0
        %v2405 = vadd.f32 %v2261, %v2404
        %v2406 = vpop.f32.mrb[0].mxu0
        %v2407 = vpop.f32.mrb[0].mxu0
        %v2408 = vadd.f32 %v2261, %v2407
        %v2409 = vpop.f32.mrb[0].mxu0
        %2410 = vmatprep.mubr.bf16.mxu0 0
        %2411 = vmatmul.mubr.bf16.gmra.mrb[0].mxu0 %v2291
        %v2412 = vpop.f32.mrb[0].mxu0
        %v2413 = vadd.f32 %v2261, %v2412
        %v2414 = vpop.f32.mrb[0].mxu0
        %v2415 = vpop.f32.mrb[0].mxu0
        %v2416 = vadd.f32 %v2261, %v2415
        %v2417 = vpop.f32.mrb[0].mxu0
        %2418 = vmatprep.mubr.bf16.mxu0 0
        %2419 = vmatmul.mubr.bf16.gmra.mrb[0].mxu0 %v2293
        %v2420 = vpop.f32.mrb[0].mxu0
        %v2421 = vadd.f32 %v2261, %v2420
        %v2422 = vpop.f32.mrb[0].mxu0
        %v2423 = vpop.f32.mrb[0].mxu0
        %v2424 = vadd.f32 %v2261, %v2423
        %v2425 = vpop.f32.mrb[0].mxu0
        %2426 = vmatprep.mubr.bf16.mxu0 0
        %2427 = vmatmul.mubr.bf16.gmra.mrb[0].mxu0 %v2295
        %v2428 = vpop.f32.mrb[0].mxu0
        %v2429 = vadd.f32 %v2261, %v2428
        %v2430 = vpop.f32.mrb[0].mxu0
        %v2431 = vpop.f32.mrb[0].mxu0
        %v2432 = vadd.f32 %v2261, %v2431
        %v2433 = vpop.f32.mrb[0].mxu0
        %2434 = vmatprep.mubr.bf16.mxu0 0
        %2435 = vmatmul.mubr.bf16.gmra.mrb[0].mxu0 %v2297
        %v2436 = vpop.f32.mrb[0].mxu0
        %v2437 = vadd.f32 %v2261, %v2436
        %v2438 = vpop.f32.mrb[0].mxu0
        %v2439 = vpop.f32.mrb[0].mxu0
        %v2440 = vadd.f32 %v2261, %v2439
        %v2441 = vpop.f32.mrb[0].mxu0
        %2442 = vmatprep.mubr.bf16.mxu0 0
        %2443 = vmatmul.mubr.bf16.gmra.mrb[0].mxu0 %v2299
        %v2444 = vpop.f32.mrb[0].mxu0
        %v2445 = vadd.f32 %v2261, %v2444
        %v2446 = vpop.f32.mrb[0].mxu0
        %v2447 = vpop.f32.mrb[0].mxu0
        %v2448 = vadd.f32 %v2261, %v2447
        %v2449 = vpop.f32.mrb[0].mxu0
        %2450 = vmatprep.mubr.bf16.mxu0 0
        %2451 = vmatmul.mubr.bf16.gmra.mrb[0].mxu0 %v2301
        %v2452 = vpop.f32.mrb[0].mxu0
        %v2453 = vadd.f32 %v2261, %v2452
        %v2454 = vpop.f32.mrb[0].mxu0
        %v2455 = vpop.f32.mrb[0].mxu0
        %v2456 = vadd.f32 %v2261, %v2455
        %v2457 = vpop.f32.mrb[0].mxu0
        %2458 = vmatprep.mubr.bf16.mxu0 0
        %2459 = vmatmul.mubr.bf16.gmra.mrb[0].mxu0 %v2303
        %v2460 = vpop.f32.mrb[0].mxu0
        %v2461 = vadd.f32 %v2261, %v2460
        %v2462 = vpop.f32.mrb[0].mxu0
        %v2463 = vpop.f32.mrb[0].mxu0
        %v2464 = vadd.f32 %v2261, %v2463
        %v2465 = vpop.f32.mrb[0].mxu0
        %2466 = vmatprep.mubr.bf16.mxu0 0
        %2467 = vmatmul.mubr.bf16.gmra.mrb[0].mxu0 %v2305
        %v2468 = vpop.f32.mrb[0].mxu0
        %v2469 = vadd.f32 %v2261, %v2468
        %v2470 = vpop.f32.mrb[0].mxu0
        %v2471 = vpop.f32.mrb[0].mxu0
        %v2472 = vadd.f32 %v2261, %v2471
        %v2473 = vpop.f32.mrb[0].mxu0
        %2474 = vdwg.mxu0
        %v2475 = vmax.f32 %v2349, 0.0
        %v2476 = vmax.f32 %v2352, 0.0
        %v2477 = vmax.f32 %v2357, 0.0
        %v2478 = vmax.f32 %v2360, 0.0
        %v2479 = vmax.f32 %v2365, 0.0
        %v2480 = vmax.f32 %v2368, 0.0
        %v2481 = vmax.f32 %v2373, 0.0
        %v2482 = vmax.f32 %v2376, 0.0
        %v2483 = vmax.f32 %v2381, 0.0
        %v2484 = vmax.f32 %v2384, 0.0
        %v2485 = vmax.f32 %v2389, 0.0
        %v2486 = vmax.f32 %v2392, 0.0
        %v2487 = vmax.f32 %v2397, 0.0
        %v2488 = vmax.f32 %v2400, 0.0
        %v2489 = vmax.f32 %v2405, 0.0
        %v2490 = vmax.f32 %v2408, 0.0
        %v2491 = vmax.f32 %v2413, 0.0
        %v2492 = vmax.f32 %v2416, 0.0
        %v2493 = vmax.f32 %v2421, 0.0
        %v2494 = vmax.f32 %v2424, 0.0
        %v2495 = vmax.f32 %v2429, 0.0
        %v2496 = vmax.f32 %v2432, 0.0
        %v2497 = vmax.f32 %v2437, 0.0
        %v2498 = vmax.f32 %v2440, 0.0
        %v2499 = vmax.f32 %v2445, 0.0
        %v2500 = vmax.f32 %v2448, 0.0
        %v2501 = vmax.f32 %v2453, 0.0
        %v2502 = vmax.f32 %v2456, 0.0
        %v2503 = vmax.f32 %v2461, 0.0
        %v2504 = vmax.f32 %v2464, 0.0
        %v2505 = vmax.f32 %v2469, 0.0
        %v2506 = vmax.f32 %v2472, 0.0
        %v2507 = vld [vmem:[%s3] sm:$0xff]
        %v2508 = vld [vmem:[%s3 + $0x8] sm:$0xff]
        %v2509 = vpack.c.bf16 %v2476, %v2475
        %v2510 = vpack.c.bf16 %v2478, %v2477
        %v2511 = vpack.c.bf16 %v2480, %v2479
        %v2512 = vpack.c.bf16 %v2482, %v2481
        %v2513 = vpack.c.bf16 %v2484, %v2483
        %v2514 = vpack.c.bf16 %v2486, %v2485
        %v2515 = vpack.c.bf16 %v2488, %v2487
        %v2516 = vpack.c.bf16 %v2490, %v2489
        %v2517 = vpack.c.bf16 %v2492, %v2491
        %v2518 = vpack.c.bf16 %v2494, %v2493
        %v2519 = vpack.c.bf16 %v2496, %v2495
        %v2520 = vpack.c.bf16 %v2498, %v2497
        %v2521 = vpack.c.bf16 %v2500, %v2499
        %v2522 = vpack.c.bf16 %v2502, %v2501
        %v2523 = vpack.c.bf16 %v2504, %v2503
        %v2524 = vpack.c.bf16 %v2506, %v2505
        %v2527 = vunpack.c.l.b16 %v2507
        %v2528 = vunpack.c.h.b16 %v2507
        %v2529 = vunpack.c.l.b16 %v2508
        %v2530 = vunpack.c.h.b16 %v2508
        %v2531 = vpack.c.b16 %v2529, %v2527
        %v2532 = vpack.c.b16 %v2530, %v2528
        %2535 = vmatprep.subr.bf16.mxu0 0
        %2536 = vmatpush1.bf16.msra.mxu0 %v2509
        %2537 = vmatprep.subr.bf16.mxu0 0
        %2538 = vmatpush1.bf16.msra.mxu0 %v2510
        %2539 = vmatprep.subr.bf16.mxu0 0
        %2540 = vmatpush1.bf16.msra.mxu0 %v2511
        %2541 = vmatprep.subr.bf16.mxu0 0
        %2542 = vmatpush1.bf16.msra.mxu0 %v2512
        %2543 = vmatprep.subr.bf16.mxu0 0
        %2544 = vmatpush1.bf16.msra.mxu0 %v2513
        %2545 = vmatprep.subr.bf16.mxu0 0
        %2546 = vmatpush1.bf16.msra.mxu0 %v2514
        %2547 = vmatprep.subr.bf16.mxu0 0
        %2548 = vmatpush1.bf16.msra.mxu0 %v2515
        %2549 = vmatprep.subr.bf16.mxu0 0
        %2550 = vmatpush1.bf16.msra.mxu0 %v2516
        %2551 = vmatprep.subr.bf16.mxu0 0
        %2552 = vmatpush1.bf16.msra.mxu0 %v2517
        %2553 = vmatprep.subr.bf16.mxu0 0
        %2554 = vmatpush1.bf16.msra.mxu0 %v2518
        %2555 = vmatprep.subr.bf16.mxu0 0
        %2556 = vmatpush1.bf16.msra.mxu0 %v2519
        %2557 = vmatprep.subr.bf16.mxu0 0
        %2558 = vmatpush1.bf16.msra.mxu0 %v2520
        %2559 = vmatprep.subr.bf16.mxu0 0
        %2560 = vmatpush1.bf16.msra.mxu0 %v2521
        %2561 = vmatprep.subr.bf16.mxu0 0
        %2562 = vmatpush1.bf16.msra.mxu0 %v2522
        %2563 = vmatprep.subr.bf16.mxu0 0
        %2564 = vmatpush1.bf16.msra.mxu0 %v2523
        %2565 = vmatprep.subr.bf16.mxu0 0
        %2566 = vmatpush1.bf16.msra.mxu0 %v2524
        %2567 = vmatprep.mubr.bf16.mxu0 %v2532
        %2568 = vmatmul.mubr.bf16.gmra.mrb[0].mxu0 %v2531
        %v2569 = vpop.f32.mrb[0].mxu0
        %v2570 = vadd.f32 0.0, %v2569
        %v2571 = vpop.f32.mrb[0].mxu0
        %v2572 = vpop.f32.mrb[0].mxu0
        %v2573 = vadd.f32 0.0, %v2572
        %v2574 = vpop.f32.mrb[0].mxu0
        %2575 = vdwg.mxu0
        %2576 = vst [vmem:[%s275] sm:$0xff] %v2570
        %2577 = vst [vmem:[%s275 + $0x8] sm:$0xff] %v2573
        %v2578 = vadd.f32 %v2475, %v2476
        %v2579 = vadd.f32 %v2578, %v2477
        %v2580 = vadd.f32 %v2579, %v2478
        %v2581 = vadd.f32 %v2580, %v2479
        %v2582 = vadd.f32 %v2581, %v2480
        %v2583 = vadd.f32 %v2582, %v2481
        %v2584 = vadd.f32 %v2583, %v2482
        %v2585 = vadd.f32 %v2584, %v2483
        %v2586 = vadd.f32 %v2585, %v2484
        %v2587 = vadd.f32 %v2586, %v2485
        %v2588 = vadd.f32 %v2587, %v2486
        %v2589 = vadd.f32 %v2588, %v2487
        %v2590 = vadd.f32 %v2589, %v2488
        %v2591 = vadd.f32 %v2590, %v2489
        %v2592 = vadd.f32 %v2591, %v2490
        %v2593 = vadd.f32 %v2592, %v2491
        %v2594 = vadd.f32 %v2593, %v2492
        %v2595 = vadd.f32 %v2594, %v2493
        %v2596 = vadd.f32 %v2595, %v2494
        %v2597 = vadd.f32 %v2596, %v2495
        %v2598 = vadd.f32 %v2597, %v2496
        %v2599 = vadd.f32 %v2598, %v2497
        %v2600 = vadd.f32 %v2599, %v2498
        %v2601 = vadd.f32 %v2600, %v2499
        %v2602 = vadd.f32 %v2601, %v2500
        %v2603 = vadd.f32 %v2602, %v2501
        %v2604 = vadd.f32 %v2603, %v2502
        %v2605 = vadd.f32 %v2604, %v2503
        %v2606 = vadd.f32 %v2605, %v2504
        %v2607 = vadd.f32 %v2606, %v2505
        %v2608 = vadd.f32 %v2607, %v2506
        %v2609 = vrot.slane %v2608, 4
        %v2610 = vadd.f32 %v2608, %v2609
        %v2611 = vrot.slane %v2610, 2
        %v2612 = vadd.f32 %v2610, %v2611
        %v2613 = vrot.slane %v2612, 1
        %v2614 = vadd.f32 %v2612, %v2613
        %v2615 = vmul.f32 %v2614, 0.00390625
        %v2616 = vld [vmem:[%s4] sm:$0xff]
        %v2617 = vld [vmem:[%s4 + $0x8] sm:$0xff]
        %v2618 = vld [vmem:[%s4 + $0x10] sm:$0xff]
        %v2619 = vld [vmem:[%s4 + $0x18] sm:$0xff]
        %v2620 = vld [vmem:[%s4 + $0x20] sm:$0xff]
        %v2621 = vld [vmem:[%s4 + $0x28] sm:$0xff]
        %v2622 = vld [vmem:[%s4 + $0x30] sm:$0xff]
        %v2623 = vld [vmem:[%s4 + $0x38] sm:$0xff]
        %v2624 = vld [vmem:[%s4 + $0x40] sm:$0xff]
        %v2625 = vld [vmem:[%s4 + $0x48] sm:$0xff]
        %v2626 = vld [vmem:[%s4 + $0x50] sm:$0xff]
        %v2627 = vld [vmem:[%s4 + $0x58] sm:$0xff]
        %v2628 = vld [vmem:[%s4 + $0x60] sm:$0xff]
        %v2629 = vld [vmem:[%s4 + $0x68] sm:$0xff]
        %v2630 = vld [vmem:[%s4 + $0x70] sm:$0xff]
        %v2631 = vld [vmem:[%s4 + $0x78] sm:$0xff]
        %v2632 = vld [vmem:[%s5] sm:$0x1]
        %2633 = vmatprep.subr.mxu0 0.0
        %2634 = vmatpush1.msra.mxu0 %v2616
        %2635 = vmatprep.subr.mxu0 0.0
        %2636 = vmatpush1.msra.mxu0 %v2617
        %2637 = vmatprep.subr.mxu0 0.0
        %2638 = vmatpush1.msra.mxu0 %v2618
        %2639 = vmatprep.subr.mxu0 0.0
        %2640 = vmatpush1.msra.mxu0 %v2619
        %2641 = vmatprep.subr.mxu0 0.0
        %2642 = vmatpush1.msra.mxu0 %v2620
        %2643 = vmatprep.subr.mxu0 0.0
        %2644 = vmatpush1.msra.mxu0 %v2621
        %2645 = vmatprep.subr.mxu0 0.0
        %2646 = vmatpush1.msra.mxu0 %v2622
        %2647 = vmatprep.subr.mxu0 0.0
        %2648 = vmatpush1.msra.mxu0 %v2623
        %2649 = vmatprep.subr.mxu0 0.0
        %2650 = vmatpush1.msra.mxu0 %v2624
        %2651 = vmatprep.subr.mxu0 0.0
        %2652 = vmatpush1.msra.mxu0 %v2625
        %2653 = vmatprep.subr.mxu0 0.0
        %2654 = vmatpush1.msra.mxu0 %v2626
        %2655 = vmatprep.subr.mxu0 0.0
        %2656 = vmatpush1.msra.mxu0 %v2627
        %2657 = vmatprep.subr.mxu0 0.0
        %2658 = vmatpush1.msra.mxu0 %v2628
        %2659 = vmatprep.subr.mxu0 0.0
        %2660 = vmatpush1.msra.mxu0 %v2629
        %2661 = vmatprep.subr.mxu0 0.0
        %2662 = vmatpush1.msra.mxu0 %v2630
        %2663 = vmatprep.subr.mxu0 0.0
        %2664 = vmatpush1.msra.mxu0 %v2631
        %2665 = vmatprep.subr.mxu0 0.0
        %2666 = vmatpush1.msra.mxu0 0.0
        %2667 = vmatprep.subr.mxu0 0.0
        %2668 = vmatpush1.msra.mxu0 0.0
        %2669 = vmatprep.subr.mxu0 0.0
        %2670 = vmatpush1.msra.mxu0 0.0
        %2671 = vmatprep.subr.mxu0 0.0
        %2672 = vmatpush1.msra.mxu0 0.0
        %2673 = vmatprep.subr.mxu0 0.0
        %2674 = vmatpush1.msra.mxu0 0.0
        %2675 = vmatprep.subr.mxu0 0.0
        %2676 = vmatpush1.msra.mxu0 0.0
        %2677 = vmatprep.subr.mxu0 0.0
        %2678 = vmatpush1.msra.mxu0 0.0
        %2679 = vmatprep.subr.mxu0 0.0
        %2680 = vmatpush1.msra.mxu0 0.0
        %2681 = vmatprep.subr.mxu0 0.0
        %2682 = vmatpush1.msra.mxu0 0.0
        %2683 = vmatprep.subr.mxu0 0.0
        %2684 = vmatpush1.msra.mxu0 0.0
        %2685 = vmatprep.subr.mxu0 0.0
        %2686 = vmatpush1.msra.mxu0 0.0
        %2687 = vmatprep.subr.mxu0 0.0
        %2688 = vmatpush1.msra.mxu0 0.0
        %2689 = vmatprep.subr.mxu0 0.0
        %2690 = vmatpush1.msra.mxu0 0.0
        %2691 = vmatprep.subr.mxu0 0.0
        %2692 = vmatpush1.msra.mxu0 0.0
        %2693 = vmatprep.subr.mxu0 0.0
        %2694 = vmatpush1.msra.mxu0 0.0
        %2695 = vmatprep.subr.mxu0 0.0
        %2696 = vmatpush1.msra.mxu0 0.0
        %2697 = vmatprep.mubr.f32.mxu0 0.0
        %2698 = vmatmul.mubr.f32.gmra.mrb[0].mxu0 %v2615
        %v2699 = vpop.f32.mrb[0].mxu0
        %v2700 = vadd.f32 %v2632, %v2699
        %v2701 = vpop.f32.mrb[0].mxu0
        %2702 = vdwg.mxu0
        %2703 = vst [vmem:[%s281] sm:$0x1] %v2700
        %s2704 = sand.u32 %s164, 1
        %s2705 = scalar_lea.sflag [#allocation3], %s2704
        %s2706 = sand.u32 %s164, 1
        %s2707 = smul.addr %s2706, 16
        %s2708 = scalar_lea.vmem [#allocation2], %s2707
        %s2709 = sand.u32 %s190, 1
        %s2710 = scalar_lea.sflag [#allocation5], %s2709
        %s2711 = sand.u32 %s190, 1
        %s2712 = scalar_lea.vmem [#allocation4], %s2711
        // Predicated region
        $region45: #{encoder_forward.1} parent=43 // pred_check
          %p2713 = pneg %p174
        $region46: #{encoder_forward.1} parent=43 // pred_check_branch
          %2715 = sbr.rel (%p2713) target = $region48
        $region47: #{encoder_forward.1} parent=43 // pred_region
          %s2717 = ssub.s32 256, 256
          %2718 = vsyncadd %s2705, %s2717
          %s2719 = smul.addr %s25, 2
          %s2720 = smul.addr %s2719, 128
          %s2721 = scalar_lea.hbm %s6, %s2720
          %s2722 = sshll.u32 %s2708, 4
          %s2723 = int_to_ptr.vmem [resolvable:$true] %s2722
          %2728 = dma.vmem_to_hbm [thread:$0]  %s2723, 256, %s2721, %s2705, 128, 128, 8
        $region48: #{encoder_forward.1} parent=43 // pred_fallthru
          _
        // Predicated region
        $region49: #{encoder_forward.1} parent=43 // pred_check
          %p2729 = pneg %p200
        $region50: #{encoder_forward.1} parent=43 // pred_check_branch
          %2731 = sbr.rel (%p2729) target = $region52
        $region51: #{encoder_forward.1} parent=43 // pred_region
          %s2733 = ssub.s32 16, 16
          %2734 = vsyncadd %s2710, %s2733
          %s2735 = smul.addr %s25, 16
          %s2736 = scalar_lea.hbm %s7, %s2735
          %s2738 = sshll.u32 %s2712, 4
          %s2739 = int_to_ptr.vmem [resolvable:$true] %s2738
          %2741 = dma.vmem_to_hbm [thread:$0]  %s2739, 16, %s2736, %s2710
        $region52: #{encoder_forward.1} parent=43 // pred_fallthru
          _
      $region44: #{encoder_forward.1} parent=5 // pred_fallthru
        _
      %p2742 = scmp.le.s32.totalorder 2, %s20
      // Predicated region
      $region53: #{encoder_forward.1} parent=5 // pred_check
        %p2743 = pneg %p2742
      $region54: #{encoder_forward.1} parent=5 // pred_check_branch
        %2745 = sbr.rel (%p2743) target = $region56
      $region55: #{encoder_forward.1} parent=5 // pred_region
        %s2746 = ssub.s32 %s20, 2
        // Predicated region
        $region57: #{encoder_forward.1} parent=55 // pred_check
          %p2747 = pneg %p180
        $region58: #{encoder_forward.1} parent=55 // pred_check_branch
          %2749 = sbr.rel (%p2747) target = $region60
        $region59: #{encoder_forward.1} parent=55 // pred_region
          %s2750 = sand.u32 %s165, 1
          %s2751 = scalar_lea.sflag [#allocation3], %s2750
          %s2752 = sand.u32 %s165, 1
          %s2753 = smul.addr %s2752, 16
          %s2754 = scalar_lea.vmem [#allocation2], %s2753
          %2755 = dma.done %s2751, 256
        $region60: #{encoder_forward.1} parent=55 // pred_fallthru
          _
        // Predicated region
        $region61: #{encoder_forward.1} parent=55 // pred_check
          %p2756 = pneg %p206
        $region62: #{encoder_forward.1} parent=55 // pred_check_branch
          %2758 = sbr.rel (%p2756) target = $region64
        $region63: #{encoder_forward.1} parent=55 // pred_region
          %s2759 = sand.u32 %s191, 1
          %s2760 = scalar_lea.sflag [#allocation5], %s2759
          %s2761 = sand.u32 %s191, 1
          %s2762 = scalar_lea.vmem [#allocation4], %s2761
          %2763 = dma.done %s2760, 16
        $region64: #{encoder_forward.1} parent=55 // pred_fallthru
          _
      $region56: #{encoder_forward.1} parent=5 // pred_fallthru
        _
    $region6: #{encoder_forward.1} parent=1 // loop_footer
      %s24 = sadd.s32 1, %s20
    $region7: #{encoder_forward.1} parent=1 // loop_footer_branch
      %19 = sbr.rel target = $region3
    $region8: #{encoder_forward.1} parent=1 // loop_exit
      _
    %2764 = vsyncpa [#allocation3], 1
    %s2765 = scalar_lea.sflag [#allocation3], 1
    %2766 = vsyncpa %s2765, 1
    %2767 = vsyncpa [#allocation5], 1
    %s2768 = scalar_lea.sflag [#allocation5], 1
    %2769 = vsyncpa %s2768, 1

</llo_original>
